<compile_context>
chip_gen: v7x
topology: tpu7x:2x2x1
jax: 0.10.0
libtpu: 0.0.40
codegen_flags: <defaults>
</compile_context>

<pallas_src>
import functools

import jax
import jax.numpy as jnp
from jax.experimental import pallas as pl
from jax.experimental.pallas import tpu as pltpu

K_HOPS = 2
ALPHA = 0.5
DROPOUT_P = 0.1  # identity at inference time

_FUSED_MAX_N_PAD = 2048            # bf16 adjacency <= 8 MiB fully VMEM-resident
_DEFAULT_TM = 512                  # row tile (tiled path)
_DEFAULT_TK = 2048                 # contraction tile -> 2 MiB bf16 adjacency DMA
_VMEM_LIMIT_BYTES = 64 * 1024 * 1024


def _round_up(v, m):
    return ((v + m - 1) // m) * m


# --------------------------------------------------------------------------
# Fused path: everything VMEM-resident, all K hops + epilogue in one kernel.
# --------------------------------------------------------------------------
def _appnp_fused_kernel(adj_ref, h_ref, dinv_ref, w_ref, b_ref, o_ref, *,
                        k_hops, alpha):
    """adj_ref (n,n) bf16, h_ref (n,c) f32, dinv_ref (n,1) f32,
    w_ref (c,co) bf16, b_ref (1,co) f32, o_ref (n,co) f32."""
    h = h_ref[...]
    dinv = dinv_ref[...]
    x = h
    for _ in range(k_hops):                       # K is tiny (default 2): unrolled
        xs = (x * dinv).astype(jnp.bfloat16)      # column-side D^-1/2, bf16 operand
        ax = jnp.dot(adj_ref[...], xs, preferred_element_type=jnp.float32)
        x = (1.0 - alpha) * dinv * ax + alpha * h # row-side D^-1/2 + teleport
    y = jnp.maximum(x, 0.0).astype(jnp.bfloat16)  # ReLU; dropout = identity (eval)
    out = jnp.dot(y, w_ref[...], preferred_element_type=jnp.float32) + b_ref[...]
    o_ref[...] = out.astype(o_ref.dtype)


def _fused_call(adj_p, h_p, dinv_p, w_p, b_p, *, k_hops, alpha):
    n_pad, _ = h_p.shape
    c_out_pad = w_p.shape[1]
    kernel = functools.partial(_appnp_fused_kernel, k_hops=k_hops, alpha=alpha)
    vmem = lambda: pl.BlockSpec(memory_space=pltpu.MemorySpace.VMEM)
    return pl.pallas_call(
        kernel,
        out_shape=jax.ShapeDtypeStruct((n_pad, c_out_pad), jnp.float32),
        in_specs=[vmem(), vmem(), vmem(), vmem(), vmem()],
        out_specs=vmem(),
        compiler_params=pltpu.CompilerParams(vmem_limit_bytes=_VMEM_LIMIT_BYTES),
    )(adj_p, h_p, dinv_p, w_p, b_p)


# --------------------------------------------------------------------------
# Tiled path: one pallas_call per hop, adjacency streamed in large tiles,
# scaled-x VMEM-resident, accumulation over the contraction axis.
# --------------------------------------------------------------------------
def _appnp_hop_kernel(adj_ref, xs_ref, h_ref, dinv_ref, *rest,
                      alpha, fuse_linear, tk):
    """adj_ref (tm,tk) bf16 tile; xs_ref (n_pad,c) bf16 RESIDENT (pre-scaled by
    column D^-1/2); h_ref (tm,c) f32; dinv_ref (tm,1) f32.  If fuse_linear:
    w_ref (c,co) bf16, b_ref (1,co) f32.  acc_ref (tm,c) f32 scratch."""
    if fuse_linear:
        w_ref, b_ref, o_ref, acc_ref = rest
    else:
        o_ref, acc_ref = rest

    j = pl.program_id(1)

    @pl.when(j == 0)
    def _():
        acc_ref[...] = jnp.zeros_like(acc_ref)

    # Slice the contraction rows out of the resident xs (fetched once per call).
    k0 = pl.multiple_of(j * tk, tk)
    xs_tile = xs_ref[pl.ds(k0, tk), :]
    acc_ref[...] += jnp.dot(adj_ref[...], xs_tile,
                            preferred_element_type=jnp.float32)

    @pl.when(j == pl.num_programs(1) - 1)
    def _():
        dinv = dinv_ref[...]
        # Row-side D^-1/2 + (1-alpha) fold + teleport blend, all f32.
        y = (1.0 - alpha) * dinv * acc_ref[...] + alpha * h_ref[...]
        if fuse_linear:
            # Fused epilogue: ReLU -> Linear (+bias); dropout identity at eval.
            y = jnp.maximum(y, 0.0).astype(jnp.bfloat16)
            out = jnp.dot(y, w_ref[...], preferred_element_type=jnp.float32)
            o_ref[...] = (out + b_ref[...]).astype(o_ref.dtype)
        else:
            # Fold next hop's column-side D^-1/2 and bf16 cast into writeback:
            # output feeds directly as the next hop's resident xs.
            o_ref[...] = (dinv * y).astype(o_ref.dtype)


def _hop_call(adj_p, xs_p, h_p, dinv_p, w_p=None, b_p=None, *,
              alpha, tm, tk, fuse_linear):
    n_pad, c_pad = h_p.shape
    grid = (n_pad // tm, n_pad // tk)

    in_specs = [
        # Adjacency is the only operand whose block changes every step.
        # (If DMA is still exposed after enlarging tiles, add
        #  pipeline_mode=pl.Buffered(3) here.)
        pl.BlockSpec((tm, tk), lambda i, j: (i, j)),
        pl.BlockSpec((n_pad, c_pad), lambda i, j: (0, 0)),   # xs: VMEM resident
        pl.BlockSpec((tm, c_pad), lambda i, j: (i, 0)),      # teleport h rows
        pl.BlockSpec((tm, 1), lambda i, j: (i, 0)),          # D^-1/2 rows
    ]
    args = [adj_p, xs_p, h_p, dinv_p]

    if fuse_linear:
        c_out_pad = w_p.shape[1]
        in_specs += [
            pl.BlockSpec((c_pad, c_out_pad), lambda i, j: (0, 0)),
            pl.BlockSpec((1, c_out_pad), lambda i, j: (0, 0)),
        ]
        args += [w_p, b_p]
        out_shape = jax.ShapeDtypeStruct((n_pad, c_out_pad), jnp.float32)
        out_spec = pl.BlockSpec((tm, c_out_pad), lambda i, j: (i, 0))
    else:
        # bf16, dinv-pre-scaled intermediate (halves inter-hop HBM writeback).
        out_shape = jax.ShapeDtypeStruct((n_pad, c_pad), jnp.bfloat16)
        out_spec = pl.BlockSpec((tm, c_pad), lambda i, j: (i, 0))

    kernel = functools.partial(_appnp_hop_kernel, alpha=alpha,
                               fuse_linear=fuse_linear, tk=tk)
    return pl.pallas_call(
        kernel,
        out_shape=out_shape,
        grid_spec=pltpu.PrefetchScalarGridSpec(
            num_scalar_prefetch=0,
            grid=grid,
            in_specs=in_specs,
            out_specs=out_spec,
            scratch_shapes=[pltpu.VMEM((tm, c_pad), jnp.float32)],
        ),
        compiler_params=pltpu.CompilerParams(
            dimension_semantics=("parallel", "arbitrary"),
            vmem_limit_bytes=_VMEM_LIMIT_BYTES,
        ),
    )(*args)


# --------------------------------------------------------------------------
# Wrapper glue (minimized; hoistable for static graphs).
# --------------------------------------------------------------------------
def build_graph_operands(edge_index, edge_weight, n, n_pad):
    """Single-pass construction of the padded bf16 (A + I) and f32 D^-1/2.
    For a static graph, call once and reuse across forward passes."""
    src, dst = edge_index[0], edge_index[1]
    loop_idx = jnp.arange(n, dtype=src.dtype)
    src_all = jnp.concatenate([src, loop_idx])
    dst_all = jnp.concatenate([dst, loop_idx])
    w_all = jnp.concatenate([edge_weight.astype(jnp.float32),
                             jnp.ones((n,), jnp.float32)])
    # One O(N^2) materialization: scatter straight into the padded bf16 buffer.
    adj_p = jnp.zeros((n_pad, n_pad), jnp.bfloat16).at[dst_all, src_all].add(
        w_all.astype(jnp.bfloat16))
    # Degrees from the edge list (O(E)), f32, consistent with the reference.
    deg = jnp.zeros((n_pad,), jnp.float32).at[dst_all].add(w_all)
    dinv = jnp.where(deg > 0, jax.lax.rsqrt(deg), 0.0)
    return adj_p, dinv.reshape(n_pad, 1)


def appnp_net_forward(x, edge_index, w, b, edge_weight=None,
                      k_hops=K_HOPS, alpha=ALPHA,
                      force_path=None, tile_m=None, tile_k=None):
    """APPNP_net forward.  x: (N, C_in) f32, edge_index: (2, E) i32,
    w: (C_in, C_out) (transposed PyTorch weight), b: (C_out,).
    Returns (N, C_out) f32."""
    n, c_in = x.shape
    c_out = w.shape[1]
    if edge_weight is None:
        edge_weight = jnp.ones((edge_index.shape[1],), dtype=jnp.float32)

    c_pad = _round_up(c_in, 128)
    c_out_pad = _round_up(c_out, 128)

    use_fused = (force_path == "fused" or
                 (force_path is None and _round_up(n, 128) <= _FUSED_MAX_N_PAD))
    if use_fused:
        n_pad = _round_up(n, 128)
        tm = tk = None
    else:
        tm = tile_m if tile_m is not None else _DEFAULT_TM
        n_pad = _round_up(n, tm)
        tk = min(n_pad, tile_k if tile_k is not None else _DEFAULT_TK)
        n_pad = _round_up(n_pad, tk)

    adj_p, dinv_p = build_graph_operands(edge_index, edge_weight, n, n_pad)
    h_p = jnp.pad(x.astype(jnp.float32), ((0, n_pad - n), (0, c_pad - c_in)))
    w_p = jnp.pad(w.astype(jnp.float32),
                  ((0, c_pad - c_in), (0, c_out_pad - c_out))).astype(jnp.bfloat16)
    b_p = jnp.pad(b.astype(jnp.float32), (0, c_out_pad - c_out)).reshape(1, c_out_pad)

    if use_fused:
        out = _fused_call(adj_p, h_p, dinv_p, w_p, b_p,
                          k_hops=k_hops, alpha=alpha)
    else:
        assert k_hops >= 1
        # Hop-0 column-side D^-1/2 + bf16 cast (subsequent hops fold it into
        # the previous hop's finalize inside the kernel).
        xs = (h_p * dinv_p).astype(jnp.bfloat16)
        out = None
        for k in range(k_hops):
            if k == k_hops - 1:
                out = _hop_call(adj_p, xs, h_p, dinv_p, w_p, b_p,
                                alpha=alpha, tm=tm, tk=tk, fuse_linear=True)
            else:
                xs = _hop_call(adj_p, xs, h_p, dinv_p,
                               alpha=alpha, tm=tm, tk=tk, fuse_linear=False)
    return out[:n, :c_out]


# --------------------------------------------------------------------------
# Pure-JAX reference.
# --------------------------------------------------------------------------
def _reference(x, edge_index, w, b, edge_weight=None,
               k_hops=K_HOPS, alpha=ALPHA):
    n = x.shape[0]
    src, dst = edge_index[0], edge_index[1]
    if edge_weight is None:
        edge_weight = jnp.ones((edge_index.shape[1],), dtype=x.dtype)
    adj = jnp.zeros((n, n), jnp.float32).at[dst, src].add(edge_weight)
    adj = adj + jnp.eye(n, dtype=jnp.float32)
    deg = adj.sum(axis=1)
    dinv = jnp.where(deg > 0, 1.0 / jnp.sqrt(deg), 0.0)
    a_hat = dinv[:, None] * adj * dinv[None, :]
    h = x
    xp = x
    for _ in range(k_hops):
        xp = (1.0 - alpha) * (a_hat @ xp) + alpha * h
    xp = jnp.maximum(xp, 0.0)
    return xp @ w + b


if __name__ == "__main__":
    key = jax.random.PRNGKey(0)
    k_x, k_e, k_w, k_b = jax.random.split(key, 4)

    N = 200           # graph nodes (pads to 256)
    C_IN = 32         # in_channels
    C_OUT = 16        # out_channels
    E = 800           # edges

    x = jax.random.normal(k_x, (N, C_IN), dtype=jnp.float32)
    edge_index = jax.random.randint(k_e, (2, E), 0, N, dtype=jnp.int32)

    # PyTorch Linear params: W (C_out, C_in), b (C_out,) — stored transposed
    # as (C_in, C_out) so the kernel computes x @ W + b.
    bound = 1.0 / jnp.sqrt(jnp.float32(C_IN))
    w = jax.random.uniform(k_w, (C_IN, C_OUT), jnp.float32, -bound, bound)
    b = jax.random.uniform(k_b, (C_OUT,), jnp.float32, -bound, bound)

    ref = _reference(x, edge_index, w, b)

    # Fused, fully VMEM-resident path (default for this problem size).
    fwd_fused = jax.jit(appnp_net_forward)
    out = jax.block_until_ready(fwd_fused(x, edge_index, w, b))
    assert out.shape == (N, C_OUT)
    assert jnp.allclose(out, ref, atol=3e-2, rtol=3e-2), "fused path mismatch"

    # Tiled/pipelined path (what large graphs take), exercised at test scale
    # with small tile overrides to get a multi-tile grid (production defaults
    # are tm=512, tk=2048 — see _DEFAULT_TM/_DEFAULT_TK).
    fwd_tiled = jax.jit(functools.partial(
        appnp_net_forward, force_path="tiled", tile_m=128, tile_k=128))
    out_t = jax.block_until_ready(fwd_tiled(x, edge_index, w, b))
    assert out_t.shape == (N, C_OUT)
    assert jnp.allclose(out_t, ref, atol=3e-2, rtol=3e-2), "tiled path mismatch"

    print("KERNEL_OK")
</pallas_src>

<mosaic_0001>
module attributes {stable_mosaic.version = 11 : i64} {
  func.func @_appnp_fused_kernel(%arg0: memref<256x256xbf16, #tpu.memory_space<vmem>>, %arg1: memref<256x128xf32, #tpu.memory_space<vmem>>, %arg2: memref<256x1xf32, #tpu.memory_space<vmem>>, %arg3: memref<128x128xbf16, #tpu.memory_space<vmem>>, %arg4: memref<1x128xf32, #tpu.memory_space<vmem>>, %arg5: memref<256x128xf32, #tpu.memory_space<vmem>>) attributes {dimension_semantics = [], scalar_prefetch = 0 : i64, scratch_operands = 0 : i64, tpu.core_type = #tpu.core_type<tc>} {
    %c0 = arith.constant 0 : index
    %c0_0 = arith.constant 0 : index
    %0 = vector.load %arg1[%c0, %c0_0] : memref<256x128xf32, #tpu.memory_space<vmem>>, vector<256x128xf32>
    %c0_1 = arith.constant 0 : index
    %c0_2 = arith.constant 0 : index
    %1 = vector.load %arg2[%c0_1, %c0_2] : memref<256x1xf32, #tpu.memory_space<vmem>>, vector<256x1xf32>
    %2 = vector.broadcast %1 : vector<256x1xf32> to vector<256x128xf32>
    %3 = arith.mulf %0, %2 : vector<256x128xf32>
    %4 = arith.truncf %3 : vector<256x128xf32> to vector<256x128xbf16>
    %c0_3 = arith.constant 0 : index
    %c0_4 = arith.constant 0 : index
    %5 = vector.load %arg0[%c0_3, %c0_4] : memref<256x256xbf16, #tpu.memory_space<vmem>>, vector<256x256xbf16>
    %cst = arith.constant dense<0.000000e+00> : vector<256x128xf32>
    %6 = tpu.matmul %5, %4, %cst {dimension_numbers = #tpu.dot_dimension_numbers<[1], [0], [0], [1], [0, 0, 1, 1], [], []>} : vector<256x256xbf16>, vector<256x128xbf16>, vector<256x128xf32> -> vector<256x128xf32>
    %cst_5 = arith.constant 5.000000e-01 : f32
    %7 = vector.broadcast %cst_5 : f32 to vector<256x1xf32>
    %8 = arith.mulf %7, %1 : vector<256x1xf32>
    %9 = vector.broadcast %8 : vector<256x1xf32> to vector<256x128xf32>
    %10 = arith.mulf %9, %6 : vector<256x128xf32>
    %cst_6 = arith.constant 5.000000e-01 : f32
    %11 = vector.broadcast %cst_6 : f32 to vector<256x128xf32>
    %12 = arith.mulf %11, %0 : vector<256x128xf32>
    %13 = arith.addf %10, %12 : vector<256x128xf32>
    %14 = vector.broadcast %1 : vector<256x1xf32> to vector<256x128xf32>
    %15 = arith.mulf %13, %14 : vector<256x128xf32>
    %16 = arith.truncf %15 : vector<256x128xf32> to vector<256x128xbf16>
    %c0_7 = arith.constant 0 : index
    %c0_8 = arith.constant 0 : index
    %17 = vector.load %arg0[%c0_7, %c0_8] : memref<256x256xbf16, #tpu.memory_space<vmem>>, vector<256x256xbf16>
    %cst_9 = arith.constant dense<0.000000e+00> : vector<256x128xf32>
    %18 = tpu.matmul %17, %16, %cst_9 {dimension_numbers = #tpu.dot_dimension_numbers<[1], [0], [0], [1], [0, 0, 1, 1], [], []>} : vector<256x256xbf16>, vector<256x128xbf16>, vector<256x128xf32> -> vector<256x128xf32>
    %cst_10 = arith.constant 5.000000e-01 : f32
    %19 = vector.broadcast %cst_10 : f32 to vector<256x1xf32>
    %20 = arith.mulf %19, %1 : vector<256x1xf32>
    %21 = vector.broadcast %20 : vector<256x1xf32> to vector<256x128xf32>
    %22 = arith.mulf %21, %18 : vector<256x128xf32>
    %cst_11 = arith.constant 5.000000e-01 : f32
    %23 = vector.broadcast %cst_11 : f32 to vector<256x128xf32>
    %24 = arith.mulf %23, %0 : vector<256x128xf32>
    %25 = arith.addf %22, %24 : vector<256x128xf32>
    %cst_12 = arith.constant 0.000000e+00 : f32
    %26 = vector.broadcast %cst_12 : f32 to vector<256x128xf32>
    %27 = arith.maximumf %25, %26 : vector<256x128xf32>
    %28 = arith.truncf %27 : vector<256x128xf32> to vector<256x128xbf16>
    %c0_13 = arith.constant 0 : index
    %c0_14 = arith.constant 0 : index
    %29 = vector.load %arg3[%c0_13, %c0_14] : memref<128x128xbf16, #tpu.memory_space<vmem>>, vector<128x128xbf16>
    %cst_15 = arith.constant dense<0.000000e+00> : vector<256x128xf32>
    %30 = tpu.matmul %28, %29, %cst_15 {dimension_numbers = #tpu.dot_dimension_numbers<[1], [0], [0], [1], [0, 0, 1, 1], [], []>} : vector<256x128xbf16>, vector<128x128xbf16>, vector<256x128xf32> -> vector<256x128xf32>
    %c0_16 = arith.constant 0 : index
    %c0_17 = arith.constant 0 : index
    %31 = vector.load %arg4[%c0_16, %c0_17] : memref<1x128xf32, #tpu.memory_space<vmem>>, vector<1x128xf32>
    %32 = vector.broadcast %31 : vector<1x128xf32> to vector<256x128xf32>
    %33 = arith.addf %30, %32 : vector<256x128xf32>
    %c0_18 = arith.constant 0 : index
    %c0_19 = arith.constant 0 : index
    %34 = vector.load %arg5[%c0_18, %c0_19] : memref<256x128xf32, #tpu.memory_space<vmem>>, vector<256x128xf32>
    tpu.vector_store %arg5[%c0_18, %c0_19], %33 {strides = array<i32>} : memref<256x128xf32, #tpu.memory_space<vmem>>, vector<256x128xf32>,
    return
  }
}

</mosaic_0001>

<llo_original>
// kernel: appnp_net_forward.1
$region0: #{appnp_net_forward.1}
  #allocation0 [shape = 'u32[]', space=smem, size = 0x4, offset = 0x4, fixed_abs, tag = 'smem constant byte address 0x4 - core index']
  #allocation1 [shape = 'u32[144,128]{1,0:T(1,128)}', space=vmem, size = 0x12000, scoped, tag = 'internal scratch']
  %s0 = inlined_call_operand.hbm [shape: bf16[256,256], index: 0, kind: input, shape index: {}]
  %s1 = inlined_call_operand.hbm [shape: f32[256,128], index: 1, kind: input, shape index: {}]
  %s2 = inlined_call_operand.hbm [shape: f32[256,1], index: 2, kind: input, shape index: {}]
  %s3 = inlined_call_operand.hbm [shape: bf16[128,128], index: 3, kind: input, shape index: {}]
  %s4 = inlined_call_operand.hbm [shape: f32[1,128], index: 4, kind: input, shape index: {}]
  %s5 = inlined_call_operand.hbm [shape: f32[256,128], index: 5, kind: output, shape index: {}]
  %s6 = sld [smem:[#allocation0]]
  $region50: #{appnp_net_forward.1} parent=0
    _
  %s8 = ssub.s32 1, %s6
  %s9 = scalar_select 0, %s8, %s6
  $region1: #{appnp_net_forward.1} parent=0
    #allocation2 [shape = 'u8[131072]{0}', space=vmem, size = 0x20000, scoped, tag = 'input window, operand 0, single buffered']
    #allocation3 [shape = 's32[1]{0}', space=sflag, size = 0x4, scoped, tag = 'scoped memory for appnp_net_forward.1']
    #allocation4 [shape = 's32[1]{0}', space=sflag, size = 0x4, scoped, tag = 'scoped memory for appnp_net_forward.1']
    #allocation5 [shape = 'u8[131072]{0}', space=vmem, size = 0x20000, scoped, tag = 'input window, operand 1, single buffered']
    #allocation6 [shape = 's32[1]{0}', space=sflag, size = 0x4, scoped, tag = 'scoped memory for appnp_net_forward.1']
    #allocation7 [shape = 'u8[131072]{0}', space=vmem, size = 0x20000, scoped, tag = 'input window, operand 2, single buffered']
    #allocation8 [shape = 'u8[32768]{0}', space=vmem, size = 0x8000, scoped, tag = 'input window, operand 3, single buffered']
    #allocation9 [shape = 's32[1]{0}', space=sflag, size = 0x4, scoped, tag = 'scoped memory for appnp_net_forward.1']
    #allocation10 [shape = 'u8[512]{0}', space=vmem, size = 0x400, scoped, tag = 'input window, operand 4, single buffered']
    #allocation11 [shape = 'u8[131072]{0}', space=vmem, size = 0x20000, scoped, tag = 'output window, operand 0, single buffered']
    %10 = vsyncpa [#allocation3], 0
    %11 = vsyncpa [#allocation6], 0
    %12 = vsyncpa [#allocation9], 0
    %13 = vsyncpa [#allocation4], 0
    // Predicated region
    $region2: #{appnp_net_forward.1} parent=1 // pred_check
      _
    $region3: #{appnp_net_forward.1} parent=1 // pred_check_branch
      %15 = sbr.rel (0) target = $region5
    $region4: #{appnp_net_forward.1} parent=1 // pred_region
      %s17 = ssub.s32 4096, 4096
      %18 = vsyncadd [#allocation3], %s17
      %s19 = sshll.u32 [#allocation2], 4
      %s20 = int_to_ptr.vmem [resolvable:$true] %s19
      %25 = dma.hbm_to_vmem [thread:$0]  %s0, 4096, %s20, [#allocation3], 128, 128, 8
    $region5: #{appnp_net_forward.1} parent=1 // pred_fallthru
      _
    // Predicated region
    $region6: #{appnp_net_forward.1} parent=1 // pred_check
      _
    $region7: #{appnp_net_forward.1} parent=1 // pred_check_branch
      %27 = sbr.rel (0) target = $region9
    $region8: #{appnp_net_forward.1} parent=1 // pred_region
      %s29 = ssub.s32 4096, 4096
      %30 = vsyncadd [#allocation6], %s29
      %s31 = sshll.u32 [#allocation5], 4
      %s32 = int_to_ptr.vmem [resolvable:$true] %s31
      %37 = dma.hbm_to_vmem [thread:$0]  %s1, 4096, %s32, [#allocation6], 128, 128, 8
    $region9: #{appnp_net_forward.1} parent=1 // pred_fallthru
      _
    // Predicated region
    $region10: #{appnp_net_forward.1} parent=1 // pred_check
      _
    $region11: #{appnp_net_forward.1} parent=1 // pred_check_branch
      %39 = sbr.rel (0) target = $region13
    $region12: #{appnp_net_forward.1} parent=1 // pred_region
      %s41 = ssub.s32 4096, 4096
      %42 = vsyncadd [#allocation6], %s41
      %s43 = sshll.u32 [#allocation7], 4
      %s44 = int_to_ptr.vmem [resolvable:$true] %s43
      %49 = dma.hbm_to_vmem [thread:$0]  %s2, 4096, %s44, [#allocation6], 128, 128, 8
    $region13: #{appnp_net_forward.1} parent=1 // pred_fallthru
      _
    // Predicated region
    $region14: #{appnp_net_forward.1} parent=1 // pred_check
      _
    $region15: #{appnp_net_forward.1} parent=1 // pred_check_branch
      %51 = sbr.rel (0) target = $region17
    $region16: #{appnp_net_forward.1} parent=1 // pred_region
      %s53 = ssub.s32 1024, 1024
      %54 = vsyncadd [#allocation9], %s53
      %s55 = sshll.u32 [#allocation8], 4
      %s56 = int_to_ptr.vmem [resolvable:$true] %s55
      %61 = dma.hbm_to_vmem [thread:$0]  %s3, 1024, %s56, [#allocation9], 64, 64, 4
    $region17: #{appnp_net_forward.1} parent=1 // pred_fallthru
      _
    // Predicated region
    $region18: #{appnp_net_forward.1} parent=1 // pred_check
      _
    $region19: #{appnp_net_forward.1} parent=1 // pred_check_branch
      %63 = sbr.rel (0) target = $region21
    $region20: #{appnp_net_forward.1} parent=1 // pred_region
      %s65 = ssub.s32 16, 16
      %66 = vsyncadd [#allocation9], %s65
      %s68 = sshll.u32 [#allocation10], 4
      %s69 = int_to_ptr.vmem [resolvable:$true] %s68
      %71 = dma.hbm_to_vmem [thread:$0]  %s4, 16, %s69, [#allocation9]
    $region21: #{appnp_net_forward.1} parent=1 // pred_fallthru
      _
    // Predicated region
    $region22: #{appnp_net_forward.1} parent=1 // pred_check
      _
    $region23: #{appnp_net_forward.1} parent=1 // pred_check_branch
      %73 = sbr.rel (0) target = $region25
    $region24: #{appnp_net_forward.1} parent=1 // pred_region
      %74 = dma.done [#allocation3], 4096
    $region25: #{appnp_net_forward.1} parent=1 // pred_fallthru
      _
    // Predicated region
    $region26: #{appnp_net_forward.1} parent=1 // pred_check
      _
    $region27: #{appnp_net_forward.1} parent=1 // pred_check_branch
      %76 = sbr.rel (0) target = $region29
    $region28: #{appnp_net_forward.1} parent=1 // pred_region
      %77 = dma.done [#allocation6], 4096
    $region29: #{appnp_net_forward.1} parent=1 // pred_fallthru
      _
    // Predicated region
    $region30: #{appnp_net_forward.1} parent=1 // pred_check
      _
    $region31: #{appnp_net_forward.1} parent=1 // pred_check_branch
      %79 = sbr.rel (0) target = $region33
    $region32: #{appnp_net_forward.1} parent=1 // pred_region
      %80 = dma.done [#allocation6], 4096
    $region33: #{appnp_net_forward.1} parent=1 // pred_fallthru
      _
    // Predicated region
    $region34: #{appnp_net_forward.1} parent=1 // pred_check
      _
    $region35: #{appnp_net_forward.1} parent=1 // pred_check_branch
      %82 = sbr.rel (0) target = $region37
    $region36: #{appnp_net_forward.1} parent=1 // pred_region
      %83 = dma.done [#allocation9], 1024
    $region37: #{appnp_net_forward.1} parent=1 // pred_fallthru
      _
    // Predicated region
    $region38: #{appnp_net_forward.1} parent=1 // pred_check
      _
    $region39: #{appnp_net_forward.1} parent=1 // pred_check_branch
      %85 = sbr.rel (0) target = $region41
    $region40: #{appnp_net_forward.1} parent=1 // pred_region
      %86 = dma.done [#allocation9], 16
    $region41: #{appnp_net_forward.1} parent=1 // pred_fallthru
      _
    %v88 = vld [vmem:[#allocation5] sm:$0xff]
    %v89 = vld [vmem:[#allocation5 + $0x8] sm:$0xff]
    %v90 = vld [vmem:[#allocation5 + $0x10] sm:$0xff]
    %v91 = vld [vmem:[#allocation5 + $0x18] sm:$0xff]
    %v92 = vld [vmem:[#allocation5 + $0x20] sm:$0xff]
    %v93 = vld [vmem:[#allocation5 + $0x28] sm:$0xff]
    %v94 = vld [vmem:[#allocation5 + $0x30] sm:$0xff]
    %v95 = vld [vmem:[#allocation5 + $0x38] sm:$0xff]
    %v96 = vld [vmem:[#allocation5 + $0x40] sm:$0xff]
    %v97 = vld [vmem:[#allocation5 + $0x48] sm:$0xff]
    %v98 = vld [vmem:[#allocation5 + $0x50] sm:$0xff]
    %v99 = vld [vmem:[#allocation5 + $0x58] sm:$0xff]
    %v100 = vld [vmem:[#allocation5 + $0x60] sm:$0xff]
    %v101 = vld [vmem:[#allocation5 + $0x68] sm:$0xff]
    %v102 = vld [vmem:[#allocation5 + $0x70] sm:$0xff]
    %v103 = vld [vmem:[#allocation5 + $0x78] sm:$0xff]
    %v104 = vld [vmem:[#allocation5 + $0x80] sm:$0xff]
    %v105 = vld [vmem:[#allocation5 + $0x88] sm:$0xff]
    %v106 = vld [vmem:[#allocation5 + $0x90] sm:$0xff]
    %v107 = vld [vmem:[#allocation5 + $0x98] sm:$0xff]
    %v108 = vld [vmem:[#allocation5 + $0xa0] sm:$0xff]
    %v109 = vld [vmem:[#allocation5 + $0xa8] sm:$0xff]
    %v110 = vld [vmem:[#allocation5 + $0xb0] sm:$0xff]
    %v111 = vld [vmem:[#allocation5 + $0xb8] sm:$0xff]
    %v112 = vld [vmem:[#allocation5 + $0xc0] sm:$0xff]
    %v113 = vld [vmem:[#allocation5 + $0xc8] sm:$0xff]
    %v114 = vld [vmem:[#allocation5 + $0xd0] sm:$0xff]
    %v115 = vld [vmem:[#allocation5 + $0xd8] sm:$0xff]
    %v116 = vld [vmem:[#allocation5 + $0xe0] sm:$0xff]
    %v117 = vld [vmem:[#allocation5 + $0xe8] sm:$0xff]
    %v118 = vld [vmem:[#allocation5 + $0xf0] sm:$0xff]
    %v119 = vld [vmem:[#allocation5 + $0xf8] sm:$0xff]
    %v120 = vld [vmem:[#allocation7] sm:$0xff]
    %v121 = vld [vmem:[#allocation7 + $0x8] sm:$0xff]
    %v122 = vld [vmem:[#allocation7 + $0x10] sm:$0xff]
    %v123 = vld [vmem:[#allocation7 + $0x18] sm:$0xff]
    %v124 = vld [vmem:[#allocation7 + $0x20] sm:$0xff]
    %v125 = vld [vmem:[#allocation7 + $0x28] sm:$0xff]
    %v126 = vld [vmem:[#allocation7 + $0x30] sm:$0xff]
    %v127 = vld [vmem:[#allocation7 + $0x38] sm:$0xff]
    %v128 = vld [vmem:[#allocation7 + $0x40] sm:$0xff]
    %v129 = vld [vmem:[#allocation7 + $0x48] sm:$0xff]
    %v130 = vld [vmem:[#allocation7 + $0x50] sm:$0xff]
    %v131 = vld [vmem:[#allocation7 + $0x58] sm:$0xff]
    %v132 = vld [vmem:[#allocation7 + $0x60] sm:$0xff]
    %v133 = vld [vmem:[#allocation7 + $0x68] sm:$0xff]
    %v134 = vld [vmem:[#allocation7 + $0x70] sm:$0xff]
    %v135 = vld [vmem:[#allocation7 + $0x78] sm:$0xff]
    %v136 = vld [vmem:[#allocation7 + $0x80] sm:$0xff]
    %v137 = vld [vmem:[#allocation7 + $0x88] sm:$0xff]
    %v138 = vld [vmem:[#allocation7 + $0x90] sm:$0xff]
    %v139 = vld [vmem:[#allocation7 + $0x98] sm:$0xff]
    %v140 = vld [vmem:[#allocation7 + $0xa0] sm:$0xff]
    %v141 = vld [vmem:[#allocation7 + $0xa8] sm:$0xff]
    %v142 = vld [vmem:[#allocation7 + $0xb0] sm:$0xff]
    %v143 = vld [vmem:[#allocation7 + $0xb8] sm:$0xff]
    %v144 = vld [vmem:[#allocation7 + $0xc0] sm:$0xff]
    %v145 = vld [vmem:[#allocation7 + $0xc8] sm:$0xff]
    %v146 = vld [vmem:[#allocation7 + $0xd0] sm:$0xff]
    %v147 = vld [vmem:[#allocation7 + $0xd8] sm:$0xff]
    %v148 = vld [vmem:[#allocation7 + $0xe0] sm:$0xff]
    %v149 = vld [vmem:[#allocation7 + $0xe8] sm:$0xff]
    %v150 = vld [vmem:[#allocation7 + $0xf0] sm:$0xff]
    %v151 = vld [vmem:[#allocation7 + $0xf8] sm:$0xff]
    %153 = vset.pattern.permute.xlu0 0
    %154 = vperm.xlu0 %153, %v120
    %v155 = vpop.permute.xlu0 %154
    %158 = vset.pattern.permute.xlu0 0
    %159 = vperm.xlu0 %158, %v121
    %v160 = vpop.permute.xlu0 %159
    %163 = vset.pattern.permute.xlu0 0
    %164 = vperm.xlu0 %163, %v122
    %v165 = vpop.permute.xlu0 %164
    %168 = vset.pattern.permute.xlu0 0
    %169 = vperm.xlu0 %168, %v123
    %v170 = vpop.permute.xlu0 %169
    %173 = vset.pattern.permute.xlu0 0
    %174 = vperm.xlu0 %173, %v124
    %v175 = vpop.permute.xlu0 %174
    %178 = vset.pattern.permute.xlu0 0
    %179 = vperm.xlu0 %178, %v125
    %v180 = vpop.permute.xlu0 %179
    %183 = vset.pattern.permute.xlu0 0
    %184 = vperm.xlu0 %183, %v126
    %v185 = vpop.permute.xlu0 %184
    %188 = vset.pattern.permute.xlu0 0
    %189 = vperm.xlu0 %188, %v127
    %v190 = vpop.permute.xlu0 %189
    %193 = vset.pattern.permute.xlu0 0
    %194 = vperm.xlu0 %193, %v128
    %v195 = vpop.permute.xlu0 %194
    %198 = vset.pattern.permute.xlu0 0
    %199 = vperm.xlu0 %198, %v129
    %v200 = vpop.permute.xlu0 %199
    %203 = vset.pattern.permute.xlu0 0
    %204 = vperm.xlu0 %203, %v130
    %v205 = vpop.permute.xlu0 %204
    %208 = vset.pattern.permute.xlu0 0
    %209 = vperm.xlu0 %208, %v131
    %v210 = vpop.permute.xlu0 %209
    %213 = vset.pattern.permute.xlu0 0
    %214 = vperm.xlu0 %213, %v132
    %v215 = vpop.permute.xlu0 %214
    %218 = vset.pattern.permute.xlu0 0
    %219 = vperm.xlu0 %218, %v133
    %v220 = vpop.permute.xlu0 %219
    %223 = vset.pattern.permute.xlu0 0
    %224 = vperm.xlu0 %223, %v134
    %v225 = vpop.permute.xlu0 %224
    %228 = vset.pattern.permute.xlu0 0
    %229 = vperm.xlu0 %228, %v135
    %v230 = vpop.permute.xlu0 %229
    %233 = vset.pattern.permute.xlu0 0
    %234 = vperm.xlu0 %233, %v136
    %v235 = vpop.permute.xlu0 %234
    %238 = vset.pattern.permute.xlu0 0
    %239 = vperm.xlu0 %238, %v137
    %v240 = vpop.permute.xlu0 %239
    %243 = vset.pattern.permute.xlu0 0
    %244 = vperm.xlu0 %243, %v138
    %v245 = vpop.permute.xlu0 %244
    %248 = vset.pattern.permute.xlu0 0
    %249 = vperm.xlu0 %248, %v139
    %v250 = vpop.permute.xlu0 %249
    %253 = vset.pattern.permute.xlu0 0
    %254 = vperm.xlu0 %253, %v140
    %v255 = vpop.permute.xlu0 %254
    %258 = vset.pattern.permute.xlu0 0
    %259 = vperm.xlu0 %258, %v141
    %v260 = vpop.permute.xlu0 %259
    %263 = vset.pattern.permute.xlu0 0
    %264 = vperm.xlu0 %263, %v142
    %v265 = vpop.permute.xlu0 %264
    %268 = vset.pattern.permute.xlu0 0
    %269 = vperm.xlu0 %268, %v143
    %v270 = vpop.permute.xlu0 %269
    %273 = vset.pattern.permute.xlu0 0
    %274 = vperm.xlu0 %273, %v144
    %v275 = vpop.permute.xlu0 %274
    %278 = vset.pattern.permute.xlu0 0
    %279 = vperm.xlu0 %278, %v145
    %v280 = vpop.permute.xlu0 %279
    %283 = vset.pattern.permute.xlu0 0
    %284 = vperm.xlu0 %283, %v146
    %v285 = vpop.permute.xlu0 %284
    %288 = vset.pattern.permute.xlu0 0
    %289 = vperm.xlu0 %288, %v147
    %v290 = vpop.permute.xlu0 %289
    %293 = vset.pattern.permute.xlu0 0
    %294 = vperm.xlu0 %293, %v148
    %v295 = vpop.permute.xlu0 %294
    %298 = vset.pattern.permute.xlu0 0
    %299 = vperm.xlu0 %298, %v149
    %v300 = vpop.permute.xlu0 %299
    %303 = vset.pattern.permute.xlu0 0
    %304 = vperm.xlu0 %303, %v150
    %v305 = vpop.permute.xlu0 %304
    %308 = vset.pattern.permute.xlu0 0
    %309 = vperm.xlu0 %308, %v151
    %v310 = vpop.permute.xlu0 %309
    %v312 = vmul.f32 %v88, %v155
    %v313 = vmul.f32 %v89, %v160
    %v314 = vmul.f32 %v90, %v165
    %v315 = vmul.f32 %v91, %v170
    %v316 = vmul.f32 %v92, %v175
    %v317 = vmul.f32 %v93, %v180
    %v318 = vmul.f32 %v94, %v185
    %v319 = vmul.f32 %v95, %v190
    %v320 = vmul.f32 %v96, %v195
    %v321 = vmul.f32 %v97, %v200
    %v322 = vmul.f32 %v98, %v205
    %v323 = vmul.f32 %v99, %v210
    %v324 = vmul.f32 %v100, %v215
    %v325 = vmul.f32 %v101, %v220
    %v326 = vmul.f32 %v102, %v225
    %v327 = vmul.f32 %v103, %v230
    %v328 = vmul.f32 %v104, %v235
    %v329 = vmul.f32 %v105, %v240
    %v330 = vmul.f32 %v106, %v245
    %v331 = vmul.f32 %v107, %v250
    %v332 = vmul.f32 %v108, %v255
    %v333 = vmul.f32 %v109, %v260
    %v334 = vmul.f32 %v110, %v265
    %v335 = vmul.f32 %v111, %v270
    %v336 = vmul.f32 %v112, %v275
    %v337 = vmul.f32 %v113, %v280
    %v338 = vmul.f32 %v114, %v285
    %v339 = vmul.f32 %v115, %v290
    %v340 = vmul.f32 %v116, %v295
    %v341 = vmul.f32 %v117, %v300
    %v342 = vmul.f32 %v118, %v305
    %v343 = vmul.f32 %v119, %v310
    %v344 = vpack.c.bf16 %v313, %v312
    %v345 = vpack.c.bf16 %v315, %v314
    %v346 = vpack.c.bf16 %v317, %v316
    %v347 = vpack.c.bf16 %v319, %v318
    %v348 = vpack.c.bf16 %v321, %v320
    %v349 = vpack.c.bf16 %v323, %v322
    %v350 = vpack.c.bf16 %v325, %v324
    %v351 = vpack.c.bf16 %v327, %v326
    %v352 = vpack.c.bf16 %v329, %v328
    %v353 = vpack.c.bf16 %v331, %v330
    %v354 = vpack.c.bf16 %v333, %v332
    %v355 = vpack.c.bf16 %v335, %v334
    %v356 = vpack.c.bf16 %v337, %v336
    %v357 = vpack.c.bf16 %v339, %v338
    %v358 = vpack.c.bf16 %v341, %v340
    %v359 = vpack.c.bf16 %v343, %v342
    %v360 = vld [vmem:[#allocation2] sm:$0xff]
    %v361 = vld [vmem:[#allocation2 + $0x8] sm:$0xff]
    %v362 = vld [vmem:[#allocation2 + $0x10] sm:$0xff]
    %v363 = vld [vmem:[#allocation2 + $0x18] sm:$0xff]
    %v364 = vld [vmem:[#allocation2 + $0x20] sm:$0xff]
    %v365 = vld [vmem:[#allocation2 + $0x28] sm:$0xff]
    %v366 = vld [vmem:[#allocation2 + $0x30] sm:$0xff]
    %v367 = vld [vmem:[#allocation2 + $0x38] sm:$0xff]
    %v368 = vld [vmem:[#allocation2 + $0x40] sm:$0xff]
    %v369 = vld [vmem:[#allocation2 + $0x48] sm:$0xff]
    %v370 = vld [vmem:[#allocation2 + $0x50] sm:$0xff]
    %v371 = vld [vmem:[#allocation2 + $0x58] sm:$0xff]
    %v372 = vld [vmem:[#allocation2 + $0x60] sm:$0xff]
    %v373 = vld [vmem:[#allocation2 + $0x68] sm:$0xff]
    %v374 = vld [vmem:[#allocation2 + $0x70] sm:$0xff]
    %v375 = vld [vmem:[#allocation2 + $0x78] sm:$0xff]
    %v376 = vld [vmem:[#allocation2 + $0x80] sm:$0xff]
    %v377 = vld [vmem:[#allocation2 + $0x88] sm:$0xff]
    %v378 = vld [vmem:[#allocation2 + $0x90] sm:$0xff]
    %v379 = vld [vmem:[#allocation2 + $0x98] sm:$0xff]
    %v380 = vld [vmem:[#allocation2 + $0xa0] sm:$0xff]
    %v381 = vld [vmem:[#allocation2 + $0xa8] sm:$0xff]
    %v382 = vld [vmem:[#allocation2 + $0xb0] sm:$0xff]
    %v383 = vld [vmem:[#allocation2 + $0xb8] sm:$0xff]
    %v384 = vld [vmem:[#allocation2 + $0xc0] sm:$0xff]
    %v385 = vld [vmem:[#allocation2 + $0xc8] sm:$0xff]
    %v386 = vld [vmem:[#allocation2 + $0xd0] sm:$0xff]
    %v387 = vld [vmem:[#allocation2 + $0xd8] sm:$0xff]
    %v388 = vld [vmem:[#allocation2 + $0xe0] sm:$0xff]
    %v389 = vld [vmem:[#allocation2 + $0xe8] sm:$0xff]
    %v390 = vld [vmem:[#allocation2 + $0xf0] sm:$0xff]
    %v391 = vld [vmem:[#allocation2 + $0xf8] sm:$0xff]
    %v424 = vunpack.c.l.b16 %v360
    %v425 = vunpack.c.h.b16 %v360
    %v426 = vunpack.c.l.b16 %v361
    %v427 = vunpack.c.h.b16 %v361
    %v428 = vunpack.c.l.b16 %v362
    %v429 = vunpack.c.h.b16 %v362
    %v430 = vunpack.c.l.b16 %v363
    %v431 = vunpack.c.h.b16 %v363
    %v432 = vunpack.c.l.b16 %v364
    %v433 = vunpack.c.h.b16 %v364
    %v434 = vunpack.c.l.b16 %v365
    %v435 = vunpack.c.h.b16 %v365
    %v436 = vunpack.c.l.b16 %v366
    %v437 = vunpack.c.h.b16 %v366
    %v438 = vunpack.c.l.b16 %v367
    %v439 = vunpack.c.h.b16 %v367
    %v440 = vunpack.c.l.b16 %v368
    %v441 = vunpack.c.h.b16 %v368
    %v442 = vunpack.c.l.b16 %v369
    %v443 = vunpack.c.h.b16 %v369
    %v444 = vunpack.c.l.b16 %v370
    %v445 = vunpack.c.h.b16 %v370
    %v446 = vunpack.c.l.b16 %v371
    %v447 = vunpack.c.h.b16 %v371
    %v448 = vunpack.c.l.b16 %v372
    %v449 = vunpack.c.h.b16 %v372
    %v450 = vunpack.c.l.b16 %v373
    %v451 = vunpack.c.h.b16 %v373
    %v452 = vunpack.c.l.b16 %v374
    %v453 = vunpack.c.h.b16 %v374
    %v454 = vunpack.c.l.b16 %v375
    %v455 = vunpack.c.h.b16 %v375
    %v456 = vunpack.c.l.b16 %v376
    %v457 = vunpack.c.h.b16 %v376
    %v458 = vunpack.c.l.b16 %v377
    %v459 = vunpack.c.h.b16 %v377
    %v460 = vunpack.c.l.b16 %v378
    %v461 = vunpack.c.h.b16 %v378
    %v462 = vunpack.c.l.b16 %v379
    %v463 = vunpack.c.h.b16 %v379
    %v464 = vunpack.c.l.b16 %v380
    %v465 = vunpack.c.h.b16 %v380
    %v466 = vunpack.c.l.b16 %v381
    %v467 = vunpack.c.h.b16 %v381
    %v468 = vunpack.c.l.b16 %v382
    %v469 = vunpack.c.h.b16 %v382
    %v470 = vunpack.c.l.b16 %v383
    %v471 = vunpack.c.h.b16 %v383
    %v472 = vunpack.c.l.b16 %v384
    %v473 = vunpack.c.h.b16 %v384
    %v474 = vunpack.c.l.b16 %v385
    %v475 = vunpack.c.h.b16 %v385
    %v476 = vunpack.c.l.b16 %v386
    %v477 = vunpack.c.h.b16 %v386
    %v478 = vunpack.c.l.b16 %v387
    %v479 = vunpack.c.h.b16 %v387
    %v480 = vunpack.c.l.b16 %v388
    %v481 = vunpack.c.h.b16 %v388
    %v482 = vunpack.c.l.b16 %v389
    %v483 = vunpack.c.h.b16 %v389
    %v484 = vunpack.c.l.b16 %v390
    %v485 = vunpack.c.h.b16 %v390
    %v486 = vunpack.c.l.b16 %v391
    %v487 = vunpack.c.h.b16 %v391
    %v488 = vpack.c.b16 %v426, %v424
    %v489 = vpack.c.b16 %v427, %v425
    %v490 = vpack.c.b16 %v430, %v428
    %v491 = vpack.c.b16 %v431, %v429
    %v492 = vpack.c.b16 %v434, %v432
    %v493 = vpack.c.b16 %v435, %v433
    %v494 = vpack.c.b16 %v438, %v436
    %v495 = vpack.c.b16 %v439, %v437
    %v496 = vpack.c.b16 %v442, %v440
    %v497 = vpack.c.b16 %v443, %v441
    %v498 = vpack.c.b16 %v446, %v444
    %v499 = vpack.c.b16 %v447, %v445
    %v500 = vpack.c.b16 %v450, %v448
    %v501 = vpack.c.b16 %v451, %v449
    %v502 = vpack.c.b16 %v454, %v452
    %v503 = vpack.c.b16 %v455, %v453
    %v504 = vpack.c.b16 %v458, %v456
    %v505 = vpack.c.b16 %v459, %v457
    %v506 = vpack.c.b16 %v462, %v460
    %v507 = vpack.c.b16 %v463, %v461
    %v508 = vpack.c.b16 %v466, %v464
    %v509 = vpack.c.b16 %v467, %v465
    %v510 = vpack.c.b16 %v470, %v468
    %v511 = vpack.c.b16 %v471, %v469
    %v512 = vpack.c.b16 %v474, %v472
    %v513 = vpack.c.b16 %v475, %v473
    %v514 = vpack.c.b16 %v478, %v476
    %v515 = vpack.c.b16 %v479, %v477
    %v516 = vpack.c.b16 %v482, %v480
    %v517 = vpack.c.b16 %v483, %v481
    %v518 = vpack.c.b16 %v486, %v484
    %v519 = vpack.c.b16 %v487, %v485
    %552 = vmatprep.subr.bf16.mxu0 0
    %553 = vmatpush1.bf16.msra.mxu0 %v344
    %554 = vmatprep.subr.bf16.mxu0 0
    %555 = vmatpush1.bf16.msra.mxu0 %v345
    %556 = vmatprep.subr.bf16.mxu0 0
    %557 = vmatpush1.bf16.msra.mxu0 %v346
    %558 = vmatprep.subr.bf16.mxu0 0
    %559 = vmatpush1.bf16.msra.mxu0 %v347
    %560 = vmatprep.subr.bf16.mxu0 0
    %561 = vmatpush1.bf16.msra.mxu0 %v348
    %562 = vmatprep.subr.bf16.mxu0 0
    %563 = vmatpush1.bf16.msra.mxu0 %v349
    %564 = vmatprep.subr.bf16.mxu0 0
    %565 = vmatpush1.bf16.msra.mxu0 %v350
    %566 = vmatprep.subr.bf16.mxu0 0
    %567 = vmatpush1.bf16.msra.mxu0 %v351
    %568 = vmatprep.subr.bf16.mxu0 0
    %569 = vmatpush1.bf16.msra.mxu0 %v352
    %570 = vmatprep.subr.bf16.mxu0 0
    %571 = vmatpush1.bf16.msra.mxu0 %v353
    %572 = vmatprep.subr.bf16.mxu0 0
    %573 = vmatpush1.bf16.msra.mxu0 %v354
    %574 = vmatprep.subr.bf16.mxu0 0
    %575 = vmatpush1.bf16.msra.mxu0 %v355
    %576 = vmatprep.subr.bf16.mxu0 0
    %577 = vmatpush1.bf16.msra.mxu0 %v356
    %578 = vmatprep.subr.bf16.mxu0 0
    %579 = vmatpush1.bf16.msra.mxu0 %v357
    %580 = vmatprep.subr.bf16.mxu0 0
    %581 = vmatpush1.bf16.msra.mxu0 %v358
    %582 = vmatprep.subr.bf16.mxu0 0
    %583 = vmatpush1.bf16.msra.mxu0 %v359
    %584 = vmatprep.mubr.bf16.mxu0 %v489
    %585 = vmatmul.mubr.bf16.gmra.mrb[0].mxu0 %v488
    %v586 = vpop.f32.mrb[0].mxu0
    %v587 = vadd.f32 0.0, %v586
    %v588 = vpop.f32.mrb[0].mxu0
    %v589 = vpop.f32.mrb[0].mxu0
    %v590 = vadd.f32 0.0, %v589
    %v591 = vpop.f32.mrb[0].mxu0
    %592 = vmatprep.mubr.bf16.mxu0 %v491
    %593 = vmatmul.mubr.bf16.gmra.mrb[0].mxu0 %v490
    %v594 = vpop.f32.mrb[0].mxu0
    %v595 = vadd.f32 0.0, %v594
    %v596 = vpop.f32.mrb[0].mxu0
    %v597 = vpop.f32.mrb[0].mxu0
    %v598 = vadd.f32 0.0, %v597
    %v599 = vpop.f32.mrb[0].mxu0
    %600 = vmatprep.mubr.bf16.mxu0 %v493
    %601 = vmatmul.mubr.bf16.gmra.mrb[0].mxu0 %v492
    %v602 = vpop.f32.mrb[0].mxu0
    %v603 = vadd.f32 0.0, %v602
    %v604 = vpop.f32.mrb[0].mxu0
    %v605 = vpop.f32.mrb[0].mxu0
    %v606 = vadd.f32 0.0, %v605
    %v607 = vpop.f32.mrb[0].mxu0
    %608 = vmatprep.mubr.bf16.mxu0 %v495
    %609 = vmatmul.mubr.bf16.gmra.mrb[0].mxu0 %v494
    %v610 = vpop.f32.mrb[0].mxu0
    %v611 = vadd.f32 0.0, %v610
    %v612 = vpop.f32.mrb[0].mxu0
    %v613 = vpop.f32.mrb[0].mxu0
    %v614 = vadd.f32 0.0, %v613
    %v615 = vpop.f32.mrb[0].mxu0
    %616 = vmatprep.mubr.bf16.mxu0 %v497
    %617 = vmatmul.mubr.bf16.gmra.mrb[0].mxu0 %v496
    %v618 = vpop.f32.mrb[0].mxu0
    %v619 = vadd.f32 0.0, %v618
    %v620 = vpop.f32.mrb[0].mxu0
    %v621 = vpop.f32.mrb[0].mxu0
    %v622 = vadd.f32 0.0, %v621
    %v623 = vpop.f32.mrb[0].mxu0
    %624 = vmatprep.mubr.bf16.mxu0 %v499
    %625 = vmatmul.mubr.bf16.gmra.mrb[0].mxu0 %v498
    %v626 = vpop.f32.mrb[0].mxu0
    %v627 = vadd.f32 0.0, %v626
    %v628 = vpop.f32.mrb[0].mxu0
    %v629 = vpop.f32.mrb[0].mxu0
    %v630 = vadd.f32 0.0, %v629
    %v631 = vpop.f32.mrb[0].mxu0
    %632 = vmatprep.mubr.bf16.mxu0 %v501
    %633 = vmatmul.mubr.bf16.gmra.mrb[0].mxu0 %v500
    %v634 = vpop.f32.mrb[0].mxu0
    %v635 = vadd.f32 0.0, %v634
    %v636 = vpop.f32.mrb[0].mxu0
    %v637 = vpop.f32.mrb[0].mxu0
    %v638 = vadd.f32 0.0, %v637
    %v639 = vpop.f32.mrb[0].mxu0
    %640 = vmatprep.mubr.bf16.mxu0 %v503
    %641 = vmatmul.mubr.bf16.gmra.mrb[0].mxu0 %v502
    %v642 = vpop.f32.mrb[0].mxu0
    %v643 = vadd.f32 0.0, %v642
    %v644 = vpop.f32.mrb[0].mxu0
    %v645 = vpop.f32.mrb[0].mxu0
    %v646 = vadd.f32 0.0, %v645
    %v647 = vpop.f32.mrb[0].mxu0
    %648 = vmatprep.mubr.bf16.mxu0 %v505
    %649 = vmatmul.mubr.bf16.gmra.mrb[0].mxu0 %v504
    %v650 = vpop.f32.mrb[0].mxu0
    %v651 = vadd.f32 0.0, %v650
    %v652 = vpop.f32.mrb[0].mxu0
    %v653 = vpop.f32.mrb[0].mxu0
    %v654 = vadd.f32 0.0, %v653
    %v655 = vpop.f32.mrb[0].mxu0
    %656 = vmatprep.mubr.bf16.mxu0 %v507
    %657 = vmatmul.mubr.bf16.gmra.mrb[0].mxu0 %v506
    %v658 = vpop.f32.mrb[0].mxu0
    %v659 = vadd.f32 0.0, %v658
    %v660 = vpop.f32.mrb[0].mxu0
    %v661 = vpop.f32.mrb[0].mxu0
    %v662 = vadd.f32 0.0, %v661
    %v663 = vpop.f32.mrb[0].mxu0
    %664 = vmatprep.mubr.bf16.mxu0 %v509
    %665 = vmatmul.mubr.bf16.gmra.mrb[0].mxu0 %v508
    %v666 = vpop.f32.mrb[0].mxu0
    %v667 = vadd.f32 0.0, %v666
    %v668 = vpop.f32.mrb[0].mxu0
    %v669 = vpop.f32.mrb[0].mxu0
    %v670 = vadd.f32 0.0, %v669
    %v671 = vpop.f32.mrb[0].mxu0
    %672 = vmatprep.mubr.bf16.mxu0 %v511
    %673 = vmatmul.mubr.bf16.gmra.mrb[0].mxu0 %v510
    %v674 = vpop.f32.mrb[0].mxu0
    %v675 = vadd.f32 0.0, %v674
    %v676 = vpop.f32.mrb[0].mxu0
    %v677 = vpop.f32.mrb[0].mxu0
    %v678 = vadd.f32 0.0, %v677
    %v679 = vpop.f32.mrb[0].mxu0
    %680 = vmatprep.mubr.bf16.mxu0 %v513
    %681 = vmatmul.mubr.bf16.gmra.mrb[0].mxu0 %v512
    %v682 = vpop.f32.mrb[0].mxu0
    %v683 = vadd.f32 0.0, %v682
    %v684 = vpop.f32.mrb[0].mxu0
    %v685 = vpop.f32.mrb[0].mxu0
    %v686 = vadd.f32 0.0, %v685
    %v687 = vpop.f32.mrb[0].mxu0
    %688 = vmatprep.mubr.bf16.mxu0 %v515
    %689 = vmatmul.mubr.bf16.gmra.mrb[0].mxu0 %v514
    %v690 = vpop.f32.mrb[0].mxu0
    %v691 = vadd.f32 0.0, %v690
    %v692 = vpop.f32.mrb[0].mxu0
    %v693 = vpop.f32.mrb[0].mxu0
    %v694 = vadd.f32 0.0, %v693
    %v695 = vpop.f32.mrb[0].mxu0
    %696 = vmatprep.mubr.bf16.mxu0 %v517
    %697 = vmatmul.mubr.bf16.gmra.mrb[0].mxu0 %v516
    %v698 = vpop.f32.mrb[0].mxu0
    %v699 = vadd.f32 0.0, %v698
    %v700 = vpop.f32.mrb[0].mxu0
    %v701 = vpop.f32.mrb[0].mxu0
    %v702 = vadd.f32 0.0, %v701
    %v703 = vpop.f32.mrb[0].mxu0
    %704 = vmatprep.mubr.bf16.mxu0 %v519
    %705 = vmatmul.mubr.bf16.gmra.mrb[0].mxu0 %v518
    %v706 = vpop.f32.mrb[0].mxu0
    %v707 = vadd.f32 0.0, %v706
    %v708 = vpop.f32.mrb[0].mxu0
    %v709 = vpop.f32.mrb[0].mxu0
    %v710 = vadd.f32 0.0, %v709
    %v711 = vpop.f32.mrb[0].mxu0
    %712 = vdwg.mxu0
    %v713 = vmul.f32 %v120, 0.5
    %v714 = vmul.f32 %v121, 0.5
    %v715 = vmul.f32 %v122, 0.5
    %v716 = vmul.f32 %v123, 0.5
    %v717 = vmul.f32 %v124, 0.5
    %v718 = vmul.f32 %v125, 0.5
    %v719 = vmul.f32 %v126, 0.5
    %v720 = vmul.f32 %v127, 0.5
    %v721 = vmul.f32 %v128, 0.5
    %v722 = vmul.f32 %v129, 0.5
    %v723 = vmul.f32 %v130, 0.5
    %v724 = vmul.f32 %v131, 0.5
    %v725 = vmul.f32 %v132, 0.5
    %v726 = vmul.f32 %v133, 0.5
    %v727 = vmul.f32 %v134, 0.5
    %v728 = vmul.f32 %v135, 0.5
    %v729 = vmul.f32 %v136, 0.5
    %v730 = vmul.f32 %v137, 0.5
    %v731 = vmul.f32 %v138, 0.5
    %v732 = vmul.f32 %v139, 0.5
    %v733 = vmul.f32 %v140, 0.5
    %v734 = vmul.f32 %v141, 0.5
    %v735 = vmul.f32 %v142, 0.5
    %v736 = vmul.f32 %v143, 0.5
    %v737 = vmul.f32 %v144, 0.5
    %v738 = vmul.f32 %v145, 0.5
    %v739 = vmul.f32 %v146, 0.5
    %v740 = vmul.f32 %v147, 0.5
    %v741 = vmul.f32 %v148, 0.5
    %v742 = vmul.f32 %v149, 0.5
    %v743 = vmul.f32 %v150, 0.5
    %v744 = vmul.f32 %v151, 0.5
    %746 = vset.pattern.permute.xlu0 0
    %747 = vperm.xlu0 %746, %v713
    %v748 = vpop.permute.xlu0 %747
    %751 = vset.pattern.permute.xlu0 0
    %752 = vperm.xlu0 %751, %v714
    %v753 = vpop.permute.xlu0 %752
    %756 = vset.pattern.permute.xlu0 0
    %757 = vperm.xlu0 %756, %v715
    %v758 = vpop.permute.xlu0 %757
    %761 = vset.pattern.permute.xlu0 0
    %762 = vperm.xlu0 %761, %v716
    %v763 = vpop.permute.xlu0 %762
    %766 = vset.pattern.permute.xlu0 0
    %767 = vperm.xlu0 %766, %v717
    %v768 = vpop.permute.xlu0 %767
    %771 = vset.pattern.permute.xlu0 0
    %772 = vperm.xlu0 %771, %v718
    %v773 = vpop.permute.xlu0 %772
    %776 = vset.pattern.permute.xlu0 0
    %777 = vperm.xlu0 %776, %v719
    %v778 = vpop.permute.xlu0 %777
    %781 = vset.pattern.permute.xlu0 0
    %782 = vperm.xlu0 %781, %v720
    %v783 = vpop.permute.xlu0 %782
    %786 = vset.pattern.permute.xlu0 0
    %787 = vperm.xlu0 %786, %v721
    %v788 = vpop.permute.xlu0 %787
    %791 = vset.pattern.permute.xlu0 0
    %792 = vperm.xlu0 %791, %v722
    %v793 = vpop.permute.xlu0 %792
    %796 = vset.pattern.permute.xlu0 0
    %797 = vperm.xlu0 %796, %v723
    %v798 = vpop.permute.xlu0 %797
    %801 = vset.pattern.permute.xlu0 0
    %802 = vperm.xlu0 %801, %v724
    %v803 = vpop.permute.xlu0 %802
    %806 = vset.pattern.permute.xlu0 0
    %807 = vperm.xlu0 %806, %v725
    %v808 = vpop.permute.xlu0 %807
    %811 = vset.pattern.permute.xlu0 0
    %812 = vperm.xlu0 %811, %v726
    %v813 = vpop.permute.xlu0 %812
    %816 = vset.pattern.permute.xlu0 0
    %817 = vperm.xlu0 %816, %v727
    %v818 = vpop.permute.xlu0 %817
    %821 = vset.pattern.permute.xlu0 0
    %822 = vperm.xlu0 %821, %v728
    %v823 = vpop.permute.xlu0 %822
    %826 = vset.pattern.permute.xlu0 0
    %827 = vperm.xlu0 %826, %v729
    %v828 = vpop.permute.xlu0 %827
    %831 = vset.pattern.permute.xlu0 0
    %832 = vperm.xlu0 %831, %v730
    %v833 = vpop.permute.xlu0 %832
    %836 = vset.pattern.permute.xlu0 0
    %837 = vperm.xlu0 %836, %v731
    %v838 = vpop.permute.xlu0 %837
    %841 = vset.pattern.permute.xlu0 0
    %842 = vperm.xlu0 %841, %v732
    %v843 = vpop.permute.xlu0 %842
    %846 = vset.pattern.permute.xlu0 0
    %847 = vperm.xlu0 %846, %v733
    %v848 = vpop.permute.xlu0 %847
    %851 = vset.pattern.permute.xlu0 0
    %852 = vperm.xlu0 %851, %v734
    %v853 = vpop.permute.xlu0 %852
    %856 = vset.pattern.permute.xlu0 0
    %857 = vperm.xlu0 %856, %v735
    %v858 = vpop.permute.xlu0 %857
    %861 = vset.pattern.permute.xlu0 0
    %862 = vperm.xlu0 %861, %v736
    %v863 = vpop.permute.xlu0 %862
    %866 = vset.pattern.permute.xlu0 0
    %867 = vperm.xlu0 %866, %v737
    %v868 = vpop.permute.xlu0 %867
    %871 = vset.pattern.permute.xlu0 0
    %872 = vperm.xlu0 %871, %v738
    %v873 = vpop.permute.xlu0 %872
    %876 = vset.pattern.permute.xlu0 0
    %877 = vperm.xlu0 %876, %v739
    %v878 = vpop.permute.xlu0 %877
    %881 = vset.pattern.permute.xlu0 0
    %882 = vperm.xlu0 %881, %v740
    %v883 = vpop.permute.xlu0 %882
    %886 = vset.pattern.permute.xlu0 0
    %887 = vperm.xlu0 %886, %v741
    %v888 = vpop.permute.xlu0 %887
    %891 = vset.pattern.permute.xlu0 0
    %892 = vperm.xlu0 %891, %v742
    %v893 = vpop.permute.xlu0 %892
    %896 = vset.pattern.permute.xlu0 0
    %897 = vperm.xlu0 %896, %v743
    %v898 = vpop.permute.xlu0 %897
    %901 = vset.pattern.permute.xlu0 0
    %902 = vperm.xlu0 %901, %v744
    %v903 = vpop.permute.xlu0 %902
    %v905 = vmul.f32 %v748, %v587
    %v906 = vmul.f32 %v753, %v590
    %v907 = vmul.f32 %v758, %v595
    %v908 = vmul.f32 %v763, %v598
    %v909 = vmul.f32 %v768, %v603
    %v910 = vmul.f32 %v773, %v606
    %v911 = vmul.f32 %v778, %v611
    %v912 = vmul.f32 %v783, %v614
    %v913 = vmul.f32 %v788, %v619
    %v914 = vmul.f32 %v793, %v622
    %v915 = vmul.f32 %v798, %v627
    %v916 = vmul.f32 %v803, %v630
    %v917 = vmul.f32 %v808, %v635
    %v918 = vmul.f32 %v813, %v638
    %v919 = vmul.f32 %v818, %v643
    %v920 = vmul.f32 %v823, %v646
    %v921 = vmul.f32 %v828, %v651
    %v922 = vmul.f32 %v833, %v654
    %v923 = vmul.f32 %v838, %v659
    %v924 = vmul.f32 %v843, %v662
    %v925 = vmul.f32 %v848, %v667
    %v926 = vmul.f32 %v853, %v670
    %v927 = vmul.f32 %v858, %v675
    %v928 = vmul.f32 %v863, %v678
    %v929 = vmul.f32 %v868, %v683
    %v930 = vmul.f32 %v873, %v686
    %v931 = vmul.f32 %v878, %v691
    %v932 = vmul.f32 %v883, %v694
    %v933 = vmul.f32 %v888, %v699
    %v934 = vmul.f32 %v893, %v702
    %v935 = vmul.f32 %v898, %v707
    %v936 = vmul.f32 %v903, %v710
    %v937 = vmul.f32 %v88, 0.5
    %v938 = vmul.f32 %v89, 0.5
    %v939 = vmul.f32 %v90, 0.5
    %v940 = vmul.f32 %v91, 0.5
    %v941 = vmul.f32 %v92, 0.5
    %v942 = vmul.f32 %v93, 0.5
    %v943 = vmul.f32 %v94, 0.5
    %v944 = vmul.f32 %v95, 0.5
    %v945 = vmul.f32 %v96, 0.5
    %v946 = vmul.f32 %v97, 0.5
    %v947 = vmul.f32 %v98, 0.5
    %v948 = vmul.f32 %v99, 0.5
    %v949 = vmul.f32 %v100, 0.5
    %v950 = vmul.f32 %v101, 0.5
    %v951 = vmul.f32 %v102, 0.5
    %v952 = vmul.f32 %v103, 0.5
    %v953 = vmul.f32 %v104, 0.5
    %v954 = vmul.f32 %v105, 0.5
    %v955 = vmul.f32 %v106, 0.5
    %v956 = vmul.f32 %v107, 0.5
    %v957 = vmul.f32 %v108, 0.5
    %v958 = vmul.f32 %v109, 0.5
    %v959 = vmul.f32 %v110, 0.5
    %v960 = vmul.f32 %v111, 0.5
    %v961 = vmul.f32 %v112, 0.5
    %v962 = vmul.f32 %v113, 0.5
    %v963 = vmul.f32 %v114, 0.5
    %v964 = vmul.f32 %v115, 0.5
    %v965 = vmul.f32 %v116, 0.5
    %v966 = vmul.f32 %v117, 0.5
    %v967 = vmul.f32 %v118, 0.5
    %v968 = vmul.f32 %v119, 0.5
    %v969 = vadd.f32 %v905, %v937
    %v970 = vadd.f32 %v906, %v938
    %v971 = vadd.f32 %v907, %v939
    %v972 = vadd.f32 %v908, %v940
    %v973 = vadd.f32 %v909, %v941
    %v974 = vadd.f32 %v910, %v942
    %v975 = vadd.f32 %v911, %v943
    %v976 = vadd.f32 %v912, %v944
    %v977 = vadd.f32 %v913, %v945
    %v978 = vadd.f32 %v914, %v946
    %v979 = vadd.f32 %v915, %v947
    %v980 = vadd.f32 %v916, %v948
    %v981 = vadd.f32 %v917, %v949
    %v982 = vadd.f32 %v918, %v950
    %v983 = vadd.f32 %v919, %v951
    %v984 = vadd.f32 %v920, %v952
    %v985 = vadd.f32 %v921, %v953
    %v986 = vadd.f32 %v922, %v954
    %v987 = vadd.f32 %v923, %v955
    %v988 = vadd.f32 %v924, %v956
    %v989 = vadd.f32 %v925, %v957
    %v990 = vadd.f32 %v926, %v958
    %v991 = vadd.f32 %v927, %v959
    %v992 = vadd.f32 %v928, %v960
    %v993 = vadd.f32 %v929, %v961
    %v994 = vadd.f32 %v930, %v962
    %v995 = vadd.f32 %v931, %v963
    %v996 = vadd.f32 %v932, %v964
    %v997 = vadd.f32 %v933, %v965
    %v998 = vadd.f32 %v934, %v966
    %v999 = vadd.f32 %v935, %v967
    %v1000 = vadd.f32 %v936, %v968
    %v1001 = vmul.f32 %v969, %v155
    %v1002 = vmul.f32 %v970, %v160
    %v1003 = vmul.f32 %v971, %v165
    %v1004 = vmul.f32 %v972, %v170
    %v1005 = vmul.f32 %v973, %v175
    %v1006 = vmul.f32 %v974, %v180
    %v1007 = vmul.f32 %v975, %v185
    %v1008 = vmul.f32 %v976, %v190
    %v1009 = vmul.f32 %v977, %v195
    %v1010 = vmul.f32 %v978, %v200
    %v1011 = vmul.f32 %v979, %v205
    %v1012 = vmul.f32 %v980, %v210
    %v1013 = vmul.f32 %v981, %v215
    %v1014 = vmul.f32 %v982, %v220
    %v1015 = vmul.f32 %v983, %v225
    %v1016 = vmul.f32 %v984, %v230
    %v1017 = vmul.f32 %v985, %v235
    %v1018 = vmul.f32 %v986, %v240
    %v1019 = vmul.f32 %v987, %v245
    %v1020 = vmul.f32 %v988, %v250
    %v1021 = vmul.f32 %v989, %v255
    %v1022 = vmul.f32 %v990, %v260
    %v1023 = vmul.f32 %v991, %v265
    %v1024 = vmul.f32 %v992, %v270
    %v1025 = vmul.f32 %v993, %v275
    %v1026 = vmul.f32 %v994, %v280
    %v1027 = vmul.f32 %v995, %v285
    %v1028 = vmul.f32 %v996, %v290
    %v1029 = vmul.f32 %v997, %v295
    %v1030 = vmul.f32 %v998, %v300
    %v1031 = vmul.f32 %v999, %v305
    %v1032 = vmul.f32 %v1000, %v310
    %v1033 = vpack.c.bf16 %v1002, %v1001
    %v1034 = vpack.c.bf16 %v1004, %v1003
    %v1035 = vpack.c.bf16 %v1006, %v1005
    %v1036 = vpack.c.bf16 %v1008, %v1007
    %v1037 = vpack.c.bf16 %v1010, %v1009
    %v1038 = vpack.c.bf16 %v1012, %v1011
    %v1039 = vpack.c.bf16 %v1014, %v1013
    %v1040 = vpack.c.bf16 %v1016, %v1015
    %v1041 = vpack.c.bf16 %v1018, %v1017
    %v1042 = vpack.c.bf16 %v1020, %v1019
    %v1043 = vpack.c.bf16 %v1022, %v1021
    %v1044 = vpack.c.bf16 %v1024, %v1023
    %v1045 = vpack.c.bf16 %v1026, %v1025
    %v1046 = vpack.c.bf16 %v1028, %v1027
    %v1047 = vpack.c.bf16 %v1030, %v1029
    %v1048 = vpack.c.bf16 %v1032, %v1031
    %1049 = vmatprep.subr.bf16.mxu0 0
    %1050 = vmatpush1.bf16.msra.mxu0 %v1033
    %1051 = vmatprep.subr.bf16.mxu0 0
    %1052 = vmatpush1.bf16.msra.mxu0 %v1034
    %1053 = vmatprep.subr.bf16.mxu0 0
    %1054 = vmatpush1.bf16.msra.mxu0 %v1035
    %1055 = vmatprep.subr.bf16.mxu0 0
    %1056 = vmatpush1.bf16.msra.mxu0 %v1036
    %1057 = vmatprep.subr.bf16.mxu0 0
    %1058 = vmatpush1.bf16.msra.mxu0 %v1037
    %1059 = vmatprep.subr.bf16.mxu0 0
    %1060 = vmatpush1.bf16.msra.mxu0 %v1038
    %1061 = vmatprep.subr.bf16.mxu0 0
    %1062 = vmatpush1.bf16.msra.mxu0 %v1039
    %1063 = vmatprep.subr.bf16.mxu0 0
    %1064 = vmatpush1.bf16.msra.mxu0 %v1040
    %1065 = vmatprep.subr.bf16.mxu0 0
    %1066 = vmatpush1.bf16.msra.mxu0 %v1041
    %1067 = vmatprep.subr.bf16.mxu0 0
    %1068 = vmatpush1.bf16.msra.mxu0 %v1042
    %1069 = vmatprep.subr.bf16.mxu0 0
    %1070 = vmatpush1.bf16.msra.mxu0 %v1043
    %1071 = vmatprep.subr.bf16.mxu0 0
    %1072 = vmatpush1.bf16.msra.mxu0 %v1044
    %1073 = vmatprep.subr.bf16.mxu0 0
    %1074 = vmatpush1.bf16.msra.mxu0 %v1045
    %1075 = vmatprep.subr.bf16.mxu0 0
    %1076 = vmatpush1.bf16.msra.mxu0 %v1046
    %1077 = vmatprep.subr.bf16.mxu0 0
    %1078 = vmatpush1.bf16.msra.mxu0 %v1047
    %1079 = vmatprep.subr.bf16.mxu0 0
    %1080 = vmatpush1.bf16.msra.mxu0 %v1048
    %1081 = vmatprep.mubr.bf16.mxu0 %v489
    %1082 = vmatmul.mubr.bf16.gmra.mrb[0].mxu0 %v488
    %v1083 = vpop.f32.mrb[0].mxu0
    %v1084 = vadd.f32 0.0, %v1083
    %v1085 = vpop.f32.mrb[0].mxu0
    %v1086 = vpop.f32.mrb[0].mxu0
    %v1087 = vadd.f32 0.0, %v1086
    %v1088 = vpop.f32.mrb[0].mxu0
    %1089 = vmatprep.mubr.bf16.mxu0 %v491
    %1090 = vmatmul.mubr.bf16.gmra.mrb[0].mxu0 %v490
    %v1091 = vpop.f32.mrb[0].mxu0
    %v1092 = vadd.f32 0.0, %v1091
    %v1093 = vpop.f32.mrb[0].mxu0
    %v1094 = vpop.f32.mrb[0].mxu0
    %v1095 = vadd.f32 0.0, %v1094
    %v1096 = vpop.f32.mrb[0].mxu0
    %1097 = vmatprep.mubr.bf16.mxu0 %v493
    %1098 = vmatmul.mubr.bf16.gmra.mrb[0].mxu0 %v492
    %v1099 = vpop.f32.mrb[0].mxu0
    %v1100 = vadd.f32 0.0, %v1099
    %v1101 = vpop.f32.mrb[0].mxu0
    %v1102 = vpop.f32.mrb[0].mxu0
    %v1103 = vadd.f32 0.0, %v1102
    %v1104 = vpop.f32.mrb[0].mxu0
    %1105 = vmatprep.mubr.bf16.mxu0 %v495
    %1106 = vmatmul.mubr.bf16.gmra.mrb[0].mxu0 %v494
    %v1107 = vpop.f32.mrb[0].mxu0
    %v1108 = vadd.f32 0.0, %v1107
    %v1109 = vpop.f32.mrb[0].mxu0
    %v1110 = vpop.f32.mrb[0].mxu0
    %v1111 = vadd.f32 0.0, %v1110
    %v1112 = vpop.f32.mrb[0].mxu0
    %1113 = vmatprep.mubr.bf16.mxu0 %v497
    %1114 = vmatmul.mubr.bf16.gmra.mrb[0].mxu0 %v496
    %v1115 = vpop.f32.mrb[0].mxu0
    %v1116 = vadd.f32 0.0, %v1115
    %v1117 = vpop.f32.mrb[0].mxu0
    %v1118 = vpop.f32.mrb[0].mxu0
    %v1119 = vadd.f32 0.0, %v1118
    %v1120 = vpop.f32.mrb[0].mxu0
    %1121 = vmatprep.mubr.bf16.mxu0 %v499
    %1122 = vmatmul.mubr.bf16.gmra.mrb[0].mxu0 %v498
    %v1123 = vpop.f32.mrb[0].mxu0
    %v1124 = vadd.f32 0.0, %v1123
    %v1125 = vpop.f32.mrb[0].mxu0
    %v1126 = vpop.f32.mrb[0].mxu0
    %v1127 = vadd.f32 0.0, %v1126
    %v1128 = vpop.f32.mrb[0].mxu0
    %1129 = vmatprep.mubr.bf16.mxu0 %v501
    %1130 = vmatmul.mubr.bf16.gmra.mrb[0].mxu0 %v500
    %v1131 = vpop.f32.mrb[0].mxu0
    %v1132 = vadd.f32 0.0, %v1131
    %v1133 = vpop.f32.mrb[0].mxu0
    %v1134 = vpop.f32.mrb[0].mxu0
    %v1135 = vadd.f32 0.0, %v1134
    %v1136 = vpop.f32.mrb[0].mxu0
    %1137 = vmatprep.mubr.bf16.mxu0 %v503
    %1138 = vmatmul.mubr.bf16.gmra.mrb[0].mxu0 %v502
    %v1139 = vpop.f32.mrb[0].mxu0
    %v1140 = vadd.f32 0.0, %v1139
    %v1141 = vpop.f32.mrb[0].mxu0
    %v1142 = vpop.f32.mrb[0].mxu0
    %v1143 = vadd.f32 0.0, %v1142
    %v1144 = vpop.f32.mrb[0].mxu0
    %1145 = vmatprep.mubr.bf16.mxu0 %v505
    %1146 = vmatmul.mubr.bf16.gmra.mrb[0].mxu0 %v504
    %v1147 = vpop.f32.mrb[0].mxu0
    %v1148 = vadd.f32 0.0, %v1147
    %v1149 = vpop.f32.mrb[0].mxu0
    %v1150 = vpop.f32.mrb[0].mxu0
    %v1151 = vadd.f32 0.0, %v1150
    %v1152 = vpop.f32.mrb[0].mxu0
    %1153 = vmatprep.mubr.bf16.mxu0 %v507
    %1154 = vmatmul.mubr.bf16.gmra.mrb[0].mxu0 %v506
    %v1155 = vpop.f32.mrb[0].mxu0
    %v1156 = vadd.f32 0.0, %v1155
    %v1157 = vpop.f32.mrb[0].mxu0
    %v1158 = vpop.f32.mrb[0].mxu0
    %v1159 = vadd.f32 0.0, %v1158
    %v1160 = vpop.f32.mrb[0].mxu0
    %1161 = vmatprep.mubr.bf16.mxu0 %v509
    %1162 = vmatmul.mubr.bf16.gmra.mrb[0].mxu0 %v508
    %v1163 = vpop.f32.mrb[0].mxu0
    %v1164 = vadd.f32 0.0, %v1163
    %v1165 = vpop.f32.mrb[0].mxu0
    %v1166 = vpop.f32.mrb[0].mxu0
    %v1167 = vadd.f32 0.0, %v1166
    %v1168 = vpop.f32.mrb[0].mxu0
    %1169 = vmatprep.mubr.bf16.mxu0 %v511
    %1170 = vmatmul.mubr.bf16.gmra.mrb[0].mxu0 %v510
    %v1171 = vpop.f32.mrb[0].mxu0
    %v1172 = vadd.f32 0.0, %v1171
    %v1173 = vpop.f32.mrb[0].mxu0
    %v1174 = vpop.f32.mrb[0].mxu0
    %v1175 = vadd.f32 0.0, %v1174
    %v1176 = vpop.f32.mrb[0].mxu0
    %1177 = vmatprep.mubr.bf16.mxu0 %v513
    %1178 = vmatmul.mubr.bf16.gmra.mrb[0].mxu0 %v512
    %v1179 = vpop.f32.mrb[0].mxu0
    %v1180 = vadd.f32 0.0, %v1179
    %v1181 = vpop.f32.mrb[0].mxu0
    %v1182 = vpop.f32.mrb[0].mxu0
    %v1183 = vadd.f32 0.0, %v1182
    %v1184 = vpop.f32.mrb[0].mxu0
    %1185 = vmatprep.mubr.bf16.mxu0 %v515
    %1186 = vmatmul.mubr.bf16.gmra.mrb[0].mxu0 %v514
    %v1187 = vpop.f32.mrb[0].mxu0
    %v1188 = vadd.f32 0.0, %v1187
    %v1189 = vpop.f32.mrb[0].mxu0
    %v1190 = vpop.f32.mrb[0].mxu0
    %v1191 = vadd.f32 0.0, %v1190
    %v1192 = vpop.f32.mrb[0].mxu0
    %1193 = vmatprep.mubr.bf16.mxu0 %v517
    %1194 = vmatmul.mubr.bf16.gmra.mrb[0].mxu0 %v516
    %v1195 = vpop.f32.mrb[0].mxu0
    %v1196 = vadd.f32 0.0, %v1195
    %v1197 = vpop.f32.mrb[0].mxu0
    %v1198 = vpop.f32.mrb[0].mxu0
    %v1199 = vadd.f32 0.0, %v1198
    %v1200 = vpop.f32.mrb[0].mxu0
    %1201 = vmatprep.mubr.bf16.mxu0 %v519
    %1202 = vmatmul.mubr.bf16.gmra.mrb[0].mxu0 %v518
    %v1203 = vpop.f32.mrb[0].mxu0
    %v1204 = vadd.f32 0.0, %v1203
    %v1205 = vpop.f32.mrb[0].mxu0
    %v1206 = vpop.f32.mrb[0].mxu0
    %v1207 = vadd.f32 0.0, %v1206
    %v1208 = vpop.f32.mrb[0].mxu0
    %1209 = vdwg.mxu0
    %v1210 = vmul.f32 %v748, %v1084
    %v1211 = vmul.f32 %v753, %v1087
    %v1212 = vmul.f32 %v758, %v1092
    %v1213 = vmul.f32 %v763, %v1095
    %v1214 = vmul.f32 %v768, %v1100
    %v1215 = vmul.f32 %v773, %v1103
    %v1216 = vmul.f32 %v778, %v1108
    %v1217 = vmul.f32 %v783, %v1111
    %v1218 = vmul.f32 %v788, %v1116
    %v1219 = vmul.f32 %v793, %v1119
    %v1220 = vmul.f32 %v798, %v1124
    %v1221 = vmul.f32 %v803, %v1127
    %v1222 = vmul.f32 %v808, %v1132
    %v1223 = vmul.f32 %v813, %v1135
    %v1224 = vmul.f32 %v818, %v1140
    %v1225 = vmul.f32 %v823, %v1143
    %v1226 = vmul.f32 %v828, %v1148
    %v1227 = vmul.f32 %v833, %v1151
    %v1228 = vmul.f32 %v838, %v1156
    %v1229 = vmul.f32 %v843, %v1159
    %v1230 = vmul.f32 %v848, %v1164
    %v1231 = vmul.f32 %v853, %v1167
    %v1232 = vmul.f32 %v858, %v1172
    %v1233 = vmul.f32 %v863, %v1175
    %v1234 = vmul.f32 %v868, %v1180
    %v1235 = vmul.f32 %v873, %v1183
    %v1236 = vmul.f32 %v878, %v1188
    %v1237 = vmul.f32 %v883, %v1191
    %v1238 = vmul.f32 %v888, %v1196
    %v1239 = vmul.f32 %v893, %v1199
    %v1240 = vmul.f32 %v898, %v1204
    %v1241 = vmul.f32 %v903, %v1207
    %v1242 = vadd.f32 %v1210, %v937
    %v1243 = vadd.f32 %v1211, %v938
    %v1244 = vadd.f32 %v1212, %v939
    %v1245 = vadd.f32 %v1213, %v940
    %v1246 = vadd.f32 %v1214, %v941
    %v1247 = vadd.f32 %v1215, %v942
    %v1248 = vadd.f32 %v1216, %v943
    %v1249 = vadd.f32 %v1217, %v944
    %v1250 = vadd.f32 %v1218, %v945
    %v1251 = vadd.f32 %v1219, %v946
    %v1252 = vadd.f32 %v1220, %v947
    %v1253 = vadd.f32 %v1221, %v948
    %v1254 = vadd.f32 %v1222, %v949
    %v1255 = vadd.f32 %v1223, %v950
    %v1256 = vadd.f32 %v1224, %v951
    %v1257 = vadd.f32 %v1225, %v952
    %v1258 = vadd.f32 %v1226, %v953
    %v1259 = vadd.f32 %v1227, %v954
    %v1260 = vadd.f32 %v1228, %v955
    %v1261 = vadd.f32 %v1229, %v956
    %v1262 = vadd.f32 %v1230, %v957
    %v1263 = vadd.f32 %v1231, %v958
    %v1264 = vadd.f32 %v1232, %v959
    %v1265 = vadd.f32 %v1233, %v960
    %v1266 = vadd.f32 %v1234, %v961
    %v1267 = vadd.f32 %v1235, %v962
    %v1268 = vadd.f32 %v1236, %v963
    %v1269 = vadd.f32 %v1237, %v964
    %v1270 = vadd.f32 %v1238, %v965
    %v1271 = vadd.f32 %v1239, %v966
    %v1272 = vadd.f32 %v1240, %v967
    %v1273 = vadd.f32 %v1241, %v968
    %v1274 = vmax.f32 %v1242, 0.0
    %v1275 = vmax.f32 %v1243, 0.0
    %v1276 = vmax.f32 %v1244, 0.0
    %v1277 = vmax.f32 %v1245, 0.0
    %v1278 = vmax.f32 %v1246, 0.0
    %v1279 = vmax.f32 %v1247, 0.0
    %v1280 = vmax.f32 %v1248, 0.0
    %v1281 = vmax.f32 %v1249, 0.0
    %v1282 = vmax.f32 %v1250, 0.0
    %v1283 = vmax.f32 %v1251, 0.0
    %v1284 = vmax.f32 %v1252, 0.0
    %v1285 = vmax.f32 %v1253, 0.0
    %v1286 = vmax.f32 %v1254, 0.0
    %v1287 = vmax.f32 %v1255, 0.0
    %v1288 = vmax.f32 %v1256, 0.0
    %v1289 = vmax.f32 %v1257, 0.0
    %v1290 = vmax.f32 %v1258, 0.0
    %v1291 = vmax.f32 %v1259, 0.0
    %v1292 = vmax.f32 %v1260, 0.0
    %v1293 = vmax.f32 %v1261, 0.0
    %v1294 = vmax.f32 %v1262, 0.0
    %v1295 = vmax.f32 %v1263, 0.0
    %v1296 = vmax.f32 %v1264, 0.0
    %v1297 = vmax.f32 %v1265, 0.0
    %v1298 = vmax.f32 %v1266, 0.0
    %v1299 = vmax.f32 %v1267, 0.0
    %v1300 = vmax.f32 %v1268, 0.0
    %v1301 = vmax.f32 %v1269, 0.0
    %v1302 = vmax.f32 %v1270, 0.0
    %v1303 = vmax.f32 %v1271, 0.0
    %v1304 = vmax.f32 %v1272, 0.0
    %v1305 = vmax.f32 %v1273, 0.0
    %v1306 = vpack.c.bf16 %v1275, %v1274
    %v1307 = vpack.c.bf16 %v1277, %v1276
    %v1308 = vpack.c.bf16 %v1279, %v1278
    %v1309 = vpack.c.bf16 %v1281, %v1280
    %v1310 = vpack.c.bf16 %v1283, %v1282
    %v1311 = vpack.c.bf16 %v1285, %v1284
    %v1312 = vpack.c.bf16 %v1287, %v1286
    %v1313 = vpack.c.bf16 %v1289, %v1288
    %v1314 = vpack.c.bf16 %v1291, %v1290
    %v1315 = vpack.c.bf16 %v1293, %v1292
    %v1316 = vpack.c.bf16 %v1295, %v1294
    %v1317 = vpack.c.bf16 %v1297, %v1296
    %v1318 = vpack.c.bf16 %v1299, %v1298
    %v1319 = vpack.c.bf16 %v1301, %v1300
    %v1320 = vpack.c.bf16 %v1303, %v1302
    %v1321 = vpack.c.bf16 %v1305, %v1304
    %v1322 = vld [vmem:[#allocation8] sm:$0xf]
    %v1323 = vld [vmem:[#allocation8 + $0x4] sm:$0xf]
    %v1324 = vld [vmem:[#allocation8 + $0x8] sm:$0xf]
    %v1325 = vld [vmem:[#allocation8 + $0xc] sm:$0xf]
    %v1326 = vld [vmem:[#allocation8 + $0x10] sm:$0xf]
    %v1327 = vld [vmem:[#allocation8 + $0x14] sm:$0xf]
    %v1328 = vld [vmem:[#allocation8 + $0x18] sm:$0xf]
    %v1329 = vld [vmem:[#allocation8 + $0x1c] sm:$0xf]
    %v1330 = vld [vmem:[#allocation8 + $0x20] sm:$0xf]
    %v1331 = vld [vmem:[#allocation8 + $0x24] sm:$0xf]
    %v1332 = vld [vmem:[#allocation8 + $0x28] sm:$0xf]
    %v1333 = vld [vmem:[#allocation8 + $0x2c] sm:$0xf]
    %v1334 = vld [vmem:[#allocation8 + $0x30] sm:$0xf]
    %v1335 = vld [vmem:[#allocation8 + $0x34] sm:$0xf]
    %v1336 = vld [vmem:[#allocation8 + $0x38] sm:$0xf]
    %v1337 = vld [vmem:[#allocation8 + $0x3c] sm:$0xf]
    %v1338 = vld [vmem:[#allocation10] sm:$0x1]
    %v1340 = vlaneseq
    %v1341 = vshrl.u32 %v1340, 7
    %v1342 = vsub.s32 0, %v1341
    %v1343 = vrot.slane %v1338, %v1342
    %v1361 = vunpack.c.l.b16 %v1322
    %v1362 = vunpack.c.l.b16 %v1323
    %v1363 = vunpack.c.l.b16 %v1324
    %v1364 = vunpack.c.l.b16 %v1325
    %v1365 = vunpack.c.l.b16 %v1326
    %v1366 = vunpack.c.l.b16 %v1327
    %v1367 = vunpack.c.l.b16 %v1328
    %v1368 = vunpack.c.l.b16 %v1329
    %v1369 = vunpack.c.l.b16 %v1330
    %v1370 = vunpack.c.l.b16 %v1331
    %v1371 = vunpack.c.l.b16 %v1332
    %v1372 = vunpack.c.l.b16 %v1333
    %v1373 = vunpack.c.l.b16 %v1334
    %v1374 = vunpack.c.l.b16 %v1335
    %v1375 = vunpack.c.l.b16 %v1336
    %v1376 = vunpack.c.l.b16 %v1337
    %v1377 = vpack.c.b16 %v1362, %v1361
    %v1378 = vpack.c.b16 %v1364, %v1363
    %v1379 = vpack.c.b16 %v1366, %v1365
    %v1380 = vpack.c.b16 %v1368, %v1367
    %v1381 = vpack.c.b16 %v1370, %v1369
    %v1382 = vpack.c.b16 %v1372, %v1371
    %v1383 = vpack.c.b16 %v1374, %v1373
    %v1384 = vpack.c.b16 %v1376, %v1375
    %1393 = vmatprep.subr.bf16.mxu0 0
    %1394 = vmatpush1.bf16.msra.mxu0 %v1377
    %1395 = vmatprep.subr.bf16.mxu0 0
    %1396 = vmatpush1.bf16.msra.mxu0 %v1378
    %1397 = vmatprep.subr.bf16.mxu0 0
    %1398 = vmatpush1.bf16.msra.mxu0 %v1379
    %1399 = vmatprep.subr.bf16.mxu0 0
    %1400 = vmatpush1.bf16.msra.mxu0 %v1380
    %1401 = vmatprep.subr.bf16.mxu0 0
    %1402 = vmatpush1.bf16.msra.mxu0 %v1381
    %1403 = vmatprep.subr.bf16.mxu0 0
    %1404 = vmatpush1.bf16.msra.mxu0 %v1382
    %1405 = vmatprep.subr.bf16.mxu0 0
    %1406 = vmatpush1.bf16.msra.mxu0 %v1383
    %1407 = vmatprep.subr.bf16.mxu0 0
    %1408 = vmatpush1.bf16.msra.mxu0 %v1384
    %1409 = vmatprep.subr.bf16.mxu0 0
    %1410 = vmatpush1.bf16.msra.mxu0 0
    %1411 = vmatprep.subr.bf16.mxu0 0
    %1412 = vmatpush1.bf16.msra.mxu0 0
    %1413 = vmatprep.subr.bf16.mxu0 0
    %1414 = vmatpush1.bf16.msra.mxu0 0
    %1415 = vmatprep.subr.bf16.mxu0 0
    %1416 = vmatpush1.bf16.msra.mxu0 0
    %1417 = vmatprep.subr.bf16.mxu0 0
    %1418 = vmatpush1.bf16.msra.mxu0 0
    %1419 = vmatprep.subr.bf16.mxu0 0
    %1420 = vmatpush1.bf16.msra.mxu0 0
    %1421 = vmatprep.subr.bf16.mxu0 0
    %1422 = vmatpush1.bf16.msra.mxu0 0
    %1423 = vmatprep.subr.bf16.mxu0 0
    %1424 = vmatpush1.bf16.msra.mxu0 0
    %1425 = vmatprep.mubr.bf16.mxu0 0
    %1426 = vmatmul.mubr.bf16.gmra.mrb[0].mxu0 %v1306
    %v1427 = vpop.f32.mrb[0].mxu0
    %v1428 = vadd.f32 %v1343, %v1427
    %v1429 = vpop.f32.mrb[0].mxu0
    %v1430 = vpop.f32.mrb[0].mxu0
    %v1431 = vadd.f32 %v1343, %v1430
    %v1432 = vpop.f32.mrb[0].mxu0
    %1433 = vmatprep.mubr.bf16.mxu0 0
    %1434 = vmatmul.mubr.bf16.gmra.mrb[0].mxu0 %v1307
    %v1435 = vpop.f32.mrb[0].mxu0
    %v1436 = vadd.f32 %v1343, %v1435
    %v1437 = vpop.f32.mrb[0].mxu0
    %v1438 = vpop.f32.mrb[0].mxu0
    %v1439 = vadd.f32 %v1343, %v1438
    %v1440 = vpop.f32.mrb[0].mxu0
    %1441 = vmatprep.mubr.bf16.mxu0 0
    %1442 = vmatmul.mubr.bf16.gmra.mrb[0].mxu0 %v1308
    %v1443 = vpop.f32.mrb[0].mxu0
    %v1444 = vadd.f32 %v1343, %v1443
    %v1445 = vpop.f32.mrb[0].mxu0
    %v1446 = vpop.f32.mrb[0].mxu0
    %v1447 = vadd.f32 %v1343, %v1446
    %v1448 = vpop.f32.mrb[0].mxu0
    %1449 = vmatprep.mubr.bf16.mxu0 0
    %1450 = vmatmul.mubr.bf16.gmra.mrb[0].mxu0 %v1309
    %v1451 = vpop.f32.mrb[0].mxu0
    %v1452 = vadd.f32 %v1343, %v1451
    %v1453 = vpop.f32.mrb[0].mxu0
    %v1454 = vpop.f32.mrb[0].mxu0
    %v1455 = vadd.f32 %v1343, %v1454
    %v1456 = vpop.f32.mrb[0].mxu0
    %1457 = vmatprep.mubr.bf16.mxu0 0
    %1458 = vmatmul.mubr.bf16.gmra.mrb[0].mxu0 %v1310
    %v1459 = vpop.f32.mrb[0].mxu0
    %v1460 = vadd.f32 %v1343, %v1459
    %v1461 = vpop.f32.mrb[0].mxu0
    %v1462 = vpop.f32.mrb[0].mxu0
    %v1463 = vadd.f32 %v1343, %v1462
    %v1464 = vpop.f32.mrb[0].mxu0
    %1465 = vmatprep.mubr.bf16.mxu0 0
    %1466 = vmatmul.mubr.bf16.gmra.mrb[0].mxu0 %v1311
    %v1467 = vpop.f32.mrb[0].mxu0
    %v1468 = vadd.f32 %v1343, %v1467
    %v1469 = vpop.f32.mrb[0].mxu0
    %v1470 = vpop.f32.mrb[0].mxu0
    %v1471 = vadd.f32 %v1343, %v1470
    %v1472 = vpop.f32.mrb[0].mxu0
    %1473 = vmatprep.mubr.bf16.mxu0 0
    %1474 = vmatmul.mubr.bf16.gmra.mrb[0].mxu0 %v1312
    %v1475 = vpop.f32.mrb[0].mxu0
    %v1476 = vadd.f32 %v1343, %v1475
    %v1477 = vpop.f32.mrb[0].mxu0
    %v1478 = vpop.f32.mrb[0].mxu0
    %v1479 = vadd.f32 %v1343, %v1478
    %v1480 = vpop.f32.mrb[0].mxu0
    %1481 = vmatprep.mubr.bf16.mxu0 0
    %1482 = vmatmul.mubr.bf16.gmra.mrb[0].mxu0 %v1313
    %v1483 = vpop.f32.mrb[0].mxu0
    %v1484 = vadd.f32 %v1343, %v1483
    %v1485 = vpop.f32.mrb[0].mxu0
    %v1486 = vpop.f32.mrb[0].mxu0
    %v1487 = vadd.f32 %v1343, %v1486
    %v1488 = vpop.f32.mrb[0].mxu0
    %1489 = vmatprep.mubr.bf16.mxu0 0
    %1490 = vmatmul.mubr.bf16.gmra.mrb[0].mxu0 %v1314
    %v1491 = vpop.f32.mrb[0].mxu0
    %v1492 = vadd.f32 %v1343, %v1491
    %v1493 = vpop.f32.mrb[0].mxu0
    %v1494 = vpop.f32.mrb[0].mxu0
    %v1495 = vadd.f32 %v1343, %v1494
    %v1496 = vpop.f32.mrb[0].mxu0
    %1497 = vmatprep.mubr.bf16.mxu0 0
    %1498 = vmatmul.mubr.bf16.gmra.mrb[0].mxu0 %v1315
    %v1499 = vpop.f32.mrb[0].mxu0
    %v1500 = vadd.f32 %v1343, %v1499
    %v1501 = vpop.f32.mrb[0].mxu0
    %v1502 = vpop.f32.mrb[0].mxu0
    %v1503 = vadd.f32 %v1343, %v1502
    %v1504 = vpop.f32.mrb[0].mxu0
    %1505 = vmatprep.mubr.bf16.mxu0 0
    %1506 = vmatmul.mubr.bf16.gmra.mrb[0].mxu0 %v1316
    %v1507 = vpop.f32.mrb[0].mxu0
    %v1508 = vadd.f32 %v1343, %v1507
    %v1509 = vpop.f32.mrb[0].mxu0
    %v1510 = vpop.f32.mrb[0].mxu0
    %v1511 = vadd.f32 %v1343, %v1510
    %v1512 = vpop.f32.mrb[0].mxu0
    %1513 = vmatprep.mubr.bf16.mxu0 0
    %1514 = vmatmul.mubr.bf16.gmra.mrb[0].mxu0 %v1317
    %v1515 = vpop.f32.mrb[0].mxu0
    %v1516 = vadd.f32 %v1343, %v1515
    %v1517 = vpop.f32.mrb[0].mxu0
    %v1518 = vpop.f32.mrb[0].mxu0
    %v1519 = vadd.f32 %v1343, %v1518
    %v1520 = vpop.f32.mrb[0].mxu0
    %1521 = vmatprep.mubr.bf16.mxu0 0
    %1522 = vmatmul.mubr.bf16.gmra.mrb[0].mxu0 %v1318
    %v1523 = vpop.f32.mrb[0].mxu0
    %v1524 = vadd.f32 %v1343, %v1523
    %v1525 = vpop.f32.mrb[0].mxu0
    %v1526 = vpop.f32.mrb[0].mxu0
    %v1527 = vadd.f32 %v1343, %v1526
    %v1528 = vpop.f32.mrb[0].mxu0
    %1529 = vmatprep.mubr.bf16.mxu0 0
    %1530 = vmatmul.mubr.bf16.gmra.mrb[0].mxu0 %v1319
    %v1531 = vpop.f32.mrb[0].mxu0
    %v1532 = vadd.f32 %v1343, %v1531
    %v1533 = vpop.f32.mrb[0].mxu0
    %v1534 = vpop.f32.mrb[0].mxu0
    %v1535 = vadd.f32 %v1343, %v1534
    %v1536 = vpop.f32.mrb[0].mxu0
    %1537 = vmatprep.mubr.bf16.mxu0 0
    %1538 = vmatmul.mubr.bf16.gmra.mrb[0].mxu0 %v1320
    %v1539 = vpop.f32.mrb[0].mxu0
    %v1540 = vadd.f32 %v1343, %v1539
    %v1541 = vpop.f32.mrb[0].mxu0
    %v1542 = vpop.f32.mrb[0].mxu0
    %v1543 = vadd.f32 %v1343, %v1542
    %v1544 = vpop.f32.mrb[0].mxu0
    %1545 = vmatprep.mubr.bf16.mxu0 0
    %1546 = vmatmul.mubr.bf16.gmra.mrb[0].mxu0 %v1321
    %v1547 = vpop.f32.mrb[0].mxu0
    %v1548 = vadd.f32 %v1343, %v1547
    %v1549 = vpop.f32.mrb[0].mxu0
    %v1550 = vpop.f32.mrb[0].mxu0
    %v1551 = vadd.f32 %v1343, %v1550
    %v1552 = vpop.f32.mrb[0].mxu0
    %1553 = vdwg.mxu0
    %1554 = vst [vmem:[#allocation11] sm:$0xff] %v1428
    %1555 = vst [vmem:[#allocation11 + $0x8] sm:$0xff] %v1431
    %1556 = vst [vmem:[#allocation11 + $0x10] sm:$0xff] %v1436
    %1557 = vst [vmem:[#allocation11 + $0x18] sm:$0xff] %v1439
    %1558 = vst [vmem:[#allocation11 + $0x20] sm:$0xff] %v1444
    %1559 = vst [vmem:[#allocation11 + $0x28] sm:$0xff] %v1447
    %1560 = vst [vmem:[#allocation11 + $0x30] sm:$0xff] %v1452
    %1561 = vst [vmem:[#allocation11 + $0x38] sm:$0xff] %v1455
    %1562 = vst [vmem:[#allocation11 + $0x40] sm:$0xff] %v1460
    %1563 = vst [vmem:[#allocation11 + $0x48] sm:$0xff] %v1463
    %1564 = vst [vmem:[#allocation11 + $0x50] sm:$0xff] %v1468
    %1565 = vst [vmem:[#allocation11 + $0x58] sm:$0xff] %v1471
    %1566 = vst [vmem:[#allocation11 + $0x60] sm:$0xff] %v1476
    %1567 = vst [vmem:[#allocation11 + $0x68] sm:$0xff] %v1479
    %1568 = vst [vmem:[#allocation11 + $0x70] sm:$0xff] %v1484
    %1569 = vst [vmem:[#allocation11 + $0x78] sm:$0xff] %v1487
    %1570 = vst [vmem:[#allocation11 + $0x80] sm:$0xff] %v1492
    %1571 = vst [vmem:[#allocation11 + $0x88] sm:$0xff] %v1495
    %1572 = vst [vmem:[#allocation11 + $0x90] sm:$0xff] %v1500
    %1573 = vst [vmem:[#allocation11 + $0x98] sm:$0xff] %v1503
    %1574 = vst [vmem:[#allocation11 + $0xa0] sm:$0xff] %v1508
    %1575 = vst [vmem:[#allocation11 + $0xa8] sm:$0xff] %v1511
    %1576 = vst [vmem:[#allocation11 + $0xb0] sm:$0xff] %v1516
    %1577 = vst [vmem:[#allocation11 + $0xb8] sm:$0xff] %v1519
    %1578 = vst [vmem:[#allocation11 + $0xc0] sm:$0xff] %v1524
    %1579 = vst [vmem:[#allocation11 + $0xc8] sm:$0xff] %v1527
    %1580 = vst [vmem:[#allocation11 + $0xd0] sm:$0xff] %v1532
    %1581 = vst [vmem:[#allocation11 + $0xd8] sm:$0xff] %v1535
    %1582 = vst [vmem:[#allocation11 + $0xe0] sm:$0xff] %v1540
    %1583 = vst [vmem:[#allocation11 + $0xe8] sm:$0xff] %v1543
    %1584 = vst [vmem:[#allocation11 + $0xf0] sm:$0xff] %v1548
    %1585 = vst [vmem:[#allocation11 + $0xf8] sm:$0xff] %v1551
    // Predicated region
    $region42: #{appnp_net_forward.1} parent=1 // pred_check
      _
    $region43: #{appnp_net_forward.1} parent=1 // pred_check_branch
      %1587 = sbr.rel (0) target = $region45
    $region44: #{appnp_net_forward.1} parent=1 // pred_region
      %s1589 = ssub.s32 4096, 4096
      %1590 = vsyncadd [#allocation4], %s1589
      %s1591 = sshll.u32 [#allocation11], 4
      %s1592 = int_to_ptr.vmem [resolvable:$true] %s1591
      %1597 = dma.vmem_to_hbm [thread:$0]  %s1592, 4096, %s5, [#allocation4], 128, 128, 8
    $region45: #{appnp_net_forward.1} parent=1 // pred_fallthru
      _
    // Predicated region
    $region46: #{appnp_net_forward.1} parent=1 // pred_check
      _
    $region47: #{appnp_net_forward.1} parent=1 // pred_check_branch
      %1599 = sbr.rel (0) target = $region49
    $region48: #{appnp_net_forward.1} parent=1 // pred_region
      %1600 = dma.done [#allocation4], 4096
    $region49: #{appnp_net_forward.1} parent=1 // pred_fallthru
      _
    %1601 = vsyncpa [#allocation3], 1
    %1602 = vsyncpa [#allocation6], 1
    %1603 = vsyncpa [#allocation9], 1
    %1604 = vsyncpa [#allocation4], 1

</llo_original>
